<compile_context>
chip_gen: v7x
topology: tpu7x:2x2x1
jax: 0.10.0
libtpu: 0.0.40
codegen_flags: <defaults>
</compile_context>

<pallas_src>
import functools

import jax
import jax.numpy as jnp
import numpy as np
from jax.experimental import pallas as pl
from jax.experimental.pallas import tpu as pltpu

# ----- hyperparameters (mirror args / data in the PyTorch module) -----
B = 2                  # batch
P = 8                  # args.window
M1, M2, M3 = 2, 2, 2   # data.m1, data.m2, data.m3
M = M1 * M2 * M3
HIDC = 4               # args.hidCNN
HIDR = 16              # args.hidRNN
HIDS = 4               # args.hidSkip
CK = 3                 # args.CNN_kernel
SKIP = 2               # args.skip
HW = 3                 # args.highway_window
T = P - CK + 1
PT = int((P - CK) / SKIP)
SKIP_OFF = T - PT * SKIP
G1 = 3 * HIDR
GS = 3 * HIDS
NSKIP = PT * SKIP
# args.output_fun == 'sigmoid'


def _vmem():
    return pl.BlockSpec(memory_space=pltpu.MemorySpace.VMEM)


# ----------------------------- fused kernel ----------------------------------
def _lstnet_kernel(xf_ref, cw_ref, cb_ref, wip_ref, bip_ref,
                   whh1_ref, bhh1_ref, whhs_ref, bhhs_ref,
                   w1_ref, b1_ref, hww_ref, o_ref):
    bsz = xf_ref.shape[0]
    xf = xf_ref[...]                                           # (B, P*M)

    # Conv3d (full-extent kernel) + ReLU: only the needed, pre-permuted columns.
    co = jnp.maximum(
        jnp.dot(xf, cw_ref[...], preferred_element_type=jnp.float32) + cb_ref[...],
        0.0,
    )                                                          # (B, CK*T*HIDC)

    # Shifted-diagonal sum: columns are laid out (k, t, ch) so it is 3 slices + add.
    tw = T * HIDC
    c_bt = co[:, 0:tw] + co[:, tw:2 * tw] + co[:, 2 * tw:3 * tw]   # (B, T*HIDC)
    # c_bt[b, t*HIDC + ch] == c[b, ch, t]

    # One hoisted input-projection matmul for the main GRU AND the skip GRU.
    gi_cat = (jnp.dot(c_bt, wip_ref[...], preferred_element_type=jnp.float32)
              + bip_ref[...])                                  # (B, T*G1 + NSKIP*GS)

    # ---- main GRU over T steps (statically unrolled; only h@W_hh is serial) ----
    whh1 = whh1_ref[...]
    bhh1 = bhh1_ref[...]
    h = jnp.zeros((bsz, HIDR), jnp.float32)
    for t in range(T):
        gi = gi_cat[:, t * G1:(t + 1) * G1]
        gh = jnp.dot(h, whh1, preferred_element_type=jnp.float32) + bhh1
        r = jax.nn.sigmoid(gi[:, 0:HIDR] + gh[:, 0:HIDR])
        z = jax.nn.sigmoid(gi[:, HIDR:2 * HIDR] + gh[:, HIDR:2 * HIDR])
        n = jnp.tanh(gi[:, 2 * HIDR:3 * HIDR] + r * gh[:, 2 * HIDR:3 * HIDR])
        h = (1.0 - z) * n + z * h

    # ---- skip GRU: SKIP independent recurrences of PT steps each (unrolled) ----
    whhs = whhs_ref[...]
    bhhs = bhhs_ref[...]
    off = T * G1
    skip_h = []
    for sk in range(SKIP):
        hs = jnp.zeros((bsz, HIDS), jnp.float32)
        for p in range(PT):
            blk = p * SKIP + sk                                # time index offset in skip window
            gi = gi_cat[:, off + blk * GS: off + (blk + 1) * GS]
            gh = jnp.dot(hs, whhs, preferred_element_type=jnp.float32) + bhhs
            r = jax.nn.sigmoid(gi[:, 0:HIDS] + gh[:, 0:HIDS])
            z = jax.nn.sigmoid(gi[:, HIDS:2 * HIDS] + gh[:, HIDS:2 * HIDS])
            n = jnp.tanh(gi[:, 2 * HIDS:3 * HIDS] + r * gh[:, 2 * HIDS:3 * HIDS])
            hs = (1.0 - z) * n + z * hs
        skip_h.append(hs)

    r_cat = jnp.concatenate([h] + skip_h, axis=1)              # (B, HIDR + SKIP*HIDS)

    # linear1 (+ highway bias folded into b1) ...
    lin = jnp.dot(r_cat, w1_ref[...], preferred_element_type=jnp.float32) + b1_ref[...]

    # ... + highway on the last HW frames via a pre-expanded weight vector.
    z_tail = xf[:, (P - HW) * M:] * hww_ref[...]               # (B, HW*M)
    hwy = z_tail[:, 0:M] + z_tail[:, M:2 * M] + z_tail[:, 2 * M:3 * M]

    o_ref[...] = jax.nn.sigmoid(lin + hwy)                     # (B, M)


# ------------------------ one-time parameter preparation ---------------------
def prepare_params(params):
    # Conv weight as matmul, keeping only the CK*T*HIDC channels the diagonal
    # sum uses, column-ordered (k major, t, ch minor).
    conv_w_flat = np.asarray(params["conv_w"]).reshape(P * HIDC * CK, P * M)
    conv_b = np.asarray(params["conv_b"])
    sel = np.array([ch * CK * P + k * P + k + t
                    for k in range(CK) for t in range(T) for ch in range(HIDC)],
                   dtype=np.int64)
    conv_wt_sel = conv_w_flat[sel, :].T.copy()                 # (P*M, CK*T*HIDC)
    conv_b_sel = conv_b[sel].reshape(1, -1)

    # Block-diagonal hoisted input projection for both GRUs.
    wih1_t = np.asarray(params["gru1_wih"]).T                  # (HIDC, G1)
    wihs_t = np.asarray(params["grus_wih"]).T                  # (HIDC, GS)
    w_inproj = np.zeros((T * HIDC, T * G1 + NSKIP * GS), np.float32)
    for t in range(T):
        w_inproj[t * HIDC:(t + 1) * HIDC, t * G1:(t + 1) * G1] = wih1_t
    off = T * G1
    for blk, t in enumerate(range(SKIP_OFF, T)):
        w_inproj[t * HIDC:(t + 1) * HIDC, off + blk * GS: off + (blk + 1) * GS] = wihs_t
    b_inproj = np.concatenate(
        [np.tile(np.asarray(params["gru1_bih"]), T),
         np.tile(np.asarray(params["grus_bih"]), NSKIP)]).reshape(1, -1)

    # Highway: expand weight over the M outputs; fold its bias into linear1's bias.
    hw_w_exp = np.repeat(np.asarray(params["hw_w"]).reshape(HW), M).reshape(1, HW * M)
    lin1_b_adj = (np.asarray(params["lin1_b"]) + np.asarray(params["hw_b"])[0]).reshape(1, -1)

    f32 = jnp.float32
    return {
        "conv_wt": jnp.asarray(conv_wt_sel, f32),
        "conv_b": jnp.asarray(conv_b_sel, f32),
        "w_inproj": jnp.asarray(w_inproj, f32),
        "b_inproj": jnp.asarray(b_inproj, f32),
        "gru1_whh_t": jnp.asarray(np.asarray(params["gru1_whh"]).T, f32),
        "gru1_bhh": jnp.asarray(np.asarray(params["gru1_bhh"]).reshape(1, -1), f32),
        "grus_whh_t": jnp.asarray(np.asarray(params["grus_whh"]).T, f32),
        "grus_bhh": jnp.asarray(np.asarray(params["grus_bhh"]).reshape(1, -1), f32),
        "lin1_wt": jnp.asarray(np.asarray(params["lin1_w"]).T, f32),
        "lin1_b": jnp.asarray(lin1_b_adj, f32),
        "hw_w_exp": jnp.asarray(hw_w_exp, f32),
    }


# ------------------------------ forward pass ---------------------------------
@jax.jit
def lstnet_forward(x, prep):
    bsz = x.shape[0]
    xf = x.reshape(bsz, P * M)

    inputs = (xf, prep["conv_wt"], prep["conv_b"], prep["w_inproj"], prep["b_inproj"],
              prep["gru1_whh_t"], prep["gru1_bhh"], prep["grus_whh_t"], prep["grus_bhh"],
              prep["lin1_wt"], prep["lin1_b"], prep["hw_w_exp"])

    bytes_accessed = sum(int(np.prod(a.shape)) * 4 for a in inputs) + bsz * M * 4
    flops = 2 * (bsz * (P * M) * (CK * T * HIDC)
                 + bsz * (T * HIDC) * (T * G1 + NSKIP * GS)
                 + T * bsz * HIDR * G1
                 + NSKIP * bsz * HIDS * GS
                 + bsz * (HIDR + SKIP * HIDS) * M)
    transcendentals = T * 3 * bsz * HIDR + NSKIP * 3 * bsz * HIDS + bsz * M

    out = pl.pallas_call(
        _lstnet_kernel,
        out_shape=jax.ShapeDtypeStruct((bsz, M), jnp.float32),
        in_specs=[_vmem()] * len(inputs),
        out_specs=_vmem(),
        cost_estimate=pl.CostEstimate(flops=flops,
                                      transcendentals=transcendentals,
                                      bytes_accessed=bytes_accessed),
    )(*inputs)
    return out.reshape(bsz, M1, M2, M3)


# ------------------ pure-JAX reference for correctness check -----------------
def reference_forward(x, params):
    bsz = x.shape[0]
    xf = x.reshape(bsz, -1)
    wc = params["conv_w"].reshape(P * HIDC * CK, -1)
    conv_out = jax.nn.relu(xf @ wc.T + params["conv_b"])
    c4 = conv_out.reshape(bsz, HIDC, CK, P)
    c = sum(c4[:, :, b, b:b + T] for b in range(CK))

    def gru(seq, wih, whh, bih, bhh, h_dim):
        h = jnp.zeros((seq.shape[1], h_dim), jnp.float32)
        for t in range(seq.shape[0]):
            gi = seq[t] @ wih.T + bih
            gh = h @ whh.T + bhh
            r = jax.nn.sigmoid(gi[:, :h_dim] + gh[:, :h_dim])
            z = jax.nn.sigmoid(gi[:, h_dim:2 * h_dim] + gh[:, h_dim:2 * h_dim])
            n = jnp.tanh(gi[:, 2 * h_dim:] + r * gh[:, 2 * h_dim:])
            h = (1.0 - z) * n + z * h
        return h

    r = gru(jnp.transpose(c, (2, 0, 1)), params["gru1_wih"], params["gru1_whh"],
            params["gru1_bih"], params["gru1_bhh"], HIDR)
    s = c[:, :, T - PT * SKIP:].reshape(bsz, HIDC, PT, SKIP)
    s = jnp.transpose(s, (2, 0, 3, 1)).reshape(PT, bsz * SKIP, HIDC)
    sh = gru(s, params["grus_wih"], params["grus_whh"],
             params["grus_bih"], params["grus_bhh"], HIDS).reshape(bsz, SKIP * HIDS)
    r_cat = jnp.concatenate([r, sh], axis=1)
    res = r_cat @ params["lin1_w"].T + params["lin1_b"]
    z = jnp.transpose(x[:, P - HW:], (0, 2, 3, 4, 1)).reshape(-1, HW)
    z = (z @ params["hw_w"].T + params["hw_b"]).reshape(bsz, M)
    res = jax.nn.sigmoid(res + z)
    return res.reshape(bsz, M1, M2, M3)


if __name__ == "__main__":
    key = jax.random.PRNGKey(0)
    keys = jax.random.split(key, 16)

    def init(k, shape, scale=0.1):
        return scale * jax.random.normal(k, shape, jnp.float32)

    params = {
        "conv_w": init(keys[0], (P * HIDC * CK, P, M1, M2, M3)),
        "conv_b": init(keys[1], (P * HIDC * CK,)),
        "gru1_wih": init(keys[2], (3 * HIDR, HIDC)),
        "gru1_whh": init(keys[3], (3 * HIDR, HIDR)),
        "gru1_bih": init(keys[4], (3 * HIDR,)),
        "gru1_bhh": init(keys[5], (3 * HIDR,)),
        "grus_wih": init(keys[6], (3 * HIDS, HIDC)),
        "grus_whh": init(keys[7], (3 * HIDS, HIDS)),
        "grus_bih": init(keys[8], (3 * HIDS,)),
        "grus_bhh": init(keys[9], (3 * HIDS,)),
        "lin1_w": init(keys[10], (M, HIDR + SKIP * HIDS)),
        "lin1_b": init(keys[11], (M,)),
        "hw_w": init(keys[12], (1, HW)),
        "hw_b": init(keys[13], (1,)),
    }

    prep = prepare_params(params)   # one-time weight repacking (not per-forward)
    x = jax.random.normal(keys[14], (B, P, M1, M2, M3), jnp.float32)

    out = jax.block_until_ready(lstnet_forward(x, prep))
    ref = jax.block_until_ready(reference_forward(x, params))

    assert out.shape == (B, M1, M2, M3)
    np.testing.assert_allclose(np.asarray(out), np.asarray(ref), rtol=1e-4, atol=1e-4)
    print("KERNEL_OK")
</pallas_src>

<mosaic_0001>
module attributes {stable_mosaic.version = 11 : i64} {
  func.func @_lstnet_kernel(%arg0: memref<2x64xf32, #tpu.memory_space<vmem>>, %arg1: memref<64x72xf32, #tpu.memory_space<vmem>>, %arg2: memref<1x72xf32, #tpu.memory_space<vmem>>, %arg3: memref<24x336xf32, #tpu.memory_space<vmem>>, %arg4: memref<1x336xf32, #tpu.memory_space<vmem>>, %arg5: memref<16x48xf32, #tpu.memory_space<vmem>>, %arg6: memref<1x48xf32, #tpu.memory_space<vmem>>, %arg7: memref<4x12xf32, #tpu.memory_space<vmem>>, %arg8: memref<1x12xf32, #tpu.memory_space<vmem>>, %arg9: memref<24x8xf32, #tpu.memory_space<vmem>>, %arg10: memref<1x8xf32, #tpu.memory_space<vmem>>, %arg11: memref<1x24xf32, #tpu.memory_space<vmem>>, %arg12: memref<2x8xf32, #tpu.memory_space<vmem>>) attributes {dimension_semantics = [], scalar_prefetch = 0 : i64, scratch_operands = 0 : i64, tpu.core_type = #tpu.core_type<tc>} {
    %c0 = arith.constant 0 : index
    %c0_0 = arith.constant 0 : index
    %0 = vector.load %arg0[%c0, %c0_0] : memref<2x64xf32, #tpu.memory_space<vmem>>, vector<2x64xf32>
    %c0_1 = arith.constant 0 : index
    %c0_2 = arith.constant 0 : index
    %1 = vector.load %arg1[%c0_1, %c0_2] : memref<64x72xf32, #tpu.memory_space<vmem>>, vector<64x72xf32>
    %cst = arith.constant dense<0.000000e+00> : vector<2x72xf32>
    %2 = tpu.matmul %0, %1, %cst {dimension_numbers = #tpu.dot_dimension_numbers<[1], [0], [0], [1], [0, 0, 1, 1], [], []>} : vector<2x64xf32>, vector<64x72xf32>, vector<2x72xf32> -> vector<2x72xf32>
    %c0_3 = arith.constant 0 : index
    %c0_4 = arith.constant 0 : index
    %3 = vector.load %arg2[%c0_3, %c0_4] : memref<1x72xf32, #tpu.memory_space<vmem>>, vector<1x72xf32>
    %4 = vector.broadcast %3 : vector<1x72xf32> to vector<2x72xf32>
    %5 = arith.addf %2, %4 : vector<2x72xf32>
    %cst_5 = arith.constant 0.000000e+00 : f32
    %6 = vector.broadcast %cst_5 : f32 to vector<2x72xf32>
    %7 = arith.maximumf %5, %6 : vector<2x72xf32>
    %8 = vector.extract_strided_slice %7 {offsets = [0, 0], sizes = [2, 24], strides = [1, 1]} : vector<2x72xf32> to vector<2x24xf32>
    %9 = vector.extract_strided_slice %7 {offsets = [0, 24], sizes = [2, 24], strides = [1, 1]} : vector<2x72xf32> to vector<2x24xf32>
    %10 = arith.addf %8, %9 : vector<2x24xf32>
    %11 = vector.extract_strided_slice %7 {offsets = [0, 48], sizes = [2, 24], strides = [1, 1]} : vector<2x72xf32> to vector<2x24xf32>
    %12 = arith.addf %10, %11 : vector<2x24xf32>
    %c0_6 = arith.constant 0 : index
    %c0_7 = arith.constant 0 : index
    %13 = vector.load %arg3[%c0_6, %c0_7] : memref<24x336xf32, #tpu.memory_space<vmem>>, vector<24x336xf32>
    %cst_8 = arith.constant dense<0.000000e+00> : vector<2x336xf32>
    %14 = tpu.matmul %12, %13, %cst_8 {dimension_numbers = #tpu.dot_dimension_numbers<[1], [0], [0], [1], [0, 0, 1, 1], [], []>} : vector<2x24xf32>, vector<24x336xf32>, vector<2x336xf32> -> vector<2x336xf32>
    %c0_9 = arith.constant 0 : index
    %c0_10 = arith.constant 0 : index
    %15 = vector.load %arg4[%c0_9, %c0_10] : memref<1x336xf32, #tpu.memory_space<vmem>>, vector<1x336xf32>
    %16 = vector.broadcast %15 : vector<1x336xf32> to vector<2x336xf32>
    %17 = arith.addf %14, %16 : vector<2x336xf32>
    %c0_11 = arith.constant 0 : index
    %c0_12 = arith.constant 0 : index
    %18 = vector.load %arg5[%c0_11, %c0_12] : memref<16x48xf32, #tpu.memory_space<vmem>>, vector<16x48xf32>
    %c0_13 = arith.constant 0 : index
    %c0_14 = arith.constant 0 : index
    %19 = vector.load %arg6[%c0_13, %c0_14] : memref<1x48xf32, #tpu.memory_space<vmem>>, vector<1x48xf32>
    %cst_15 = arith.constant 0.000000e+00 : f32
    %20 = vector.broadcast %cst_15 : f32 to vector<2x16xf32>
    %21 = vector.extract_strided_slice %17 {offsets = [0, 0], sizes = [2, 48], strides = [1, 1]} : vector<2x336xf32> to vector<2x48xf32>
    %cst_16 = arith.constant dense<0.000000e+00> : vector<2x48xf32>
    %22 = tpu.matmul %20, %18, %cst_16 {dimension_numbers = #tpu.dot_dimension_numbers<[1], [0], [0], [1], [0, 0, 1, 1], [], []>} : vector<2x16xf32>, vector<16x48xf32>, vector<2x48xf32> -> vector<2x48xf32>
    %23 = vector.broadcast %19 : vector<1x48xf32> to vector<2x48xf32>
    %24 = arith.addf %22, %23 : vector<2x48xf32>
    %25 = vector.extract_strided_slice %21 {offsets = [0, 0], sizes = [2, 16], strides = [1, 1]} : vector<2x48xf32> to vector<2x16xf32>
    %26 = vector.extract_strided_slice %24 {offsets = [0, 0], sizes = [2, 16], strides = [1, 1]} : vector<2x48xf32> to vector<2x16xf32>
    %27 = arith.addf %25, %26 : vector<2x16xf32>
    %28 = arith.negf %27 : vector<2x16xf32>
    %29 = math.exp %28 : vector<2x16xf32>
    %cst_17 = arith.constant 1.000000e+00 : f32
    %30 = vector.broadcast %cst_17 : f32 to vector<2x16xf32>
    %31 = arith.addf %30, %29 : vector<2x16xf32>
    %32 = arith.divf %30, %31 : vector<2x16xf32>
    %33 = vector.extract_strided_slice %21 {offsets = [0, 16], sizes = [2, 16], strides = [1, 1]} : vector<2x48xf32> to vector<2x16xf32>
    %34 = vector.extract_strided_slice %24 {offsets = [0, 16], sizes = [2, 16], strides = [1, 1]} : vector<2x48xf32> to vector<2x16xf32>
    %35 = arith.addf %33, %34 : vector<2x16xf32>
    %36 = arith.negf %35 : vector<2x16xf32>
    %37 = math.exp %36 : vector<2x16xf32>
    %cst_18 = arith.constant 1.000000e+00 : f32
    %38 = vector.broadcast %cst_18 : f32 to vector<2x16xf32>
    %39 = arith.addf %38, %37 : vector<2x16xf32>
    %40 = arith.divf %38, %39 : vector<2x16xf32>
    %41 = vector.extract_strided_slice %21 {offsets = [0, 32], sizes = [2, 16], strides = [1, 1]} : vector<2x48xf32> to vector<2x16xf32>
    %42 = vector.extract_strided_slice %24 {offsets = [0, 32], sizes = [2, 16], strides = [1, 1]} : vector<2x48xf32> to vector<2x16xf32>
    %43 = arith.mulf %32, %42 : vector<2x16xf32>
    %44 = arith.addf %41, %43 : vector<2x16xf32>
    %45 = math.tanh %44 : vector<2x16xf32>
    %cst_19 = arith.constant 1.000000e+00 : f32
    %46 = vector.broadcast %cst_19 : f32 to vector<2x16xf32>
    %47 = arith.subf %46, %40 : vector<2x16xf32>
    %48 = arith.mulf %47, %45 : vector<2x16xf32>
    %49 = arith.mulf %40, %20 : vector<2x16xf32>
    %50 = arith.addf %48, %49 : vector<2x16xf32>
    %51 = vector.extract_strided_slice %17 {offsets = [0, 48], sizes = [2, 48], strides = [1, 1]} : vector<2x336xf32> to vector<2x48xf32>
    %cst_20 = arith.constant dense<0.000000e+00> : vector<2x48xf32>
    %52 = tpu.matmul %50, %18, %cst_20 {dimension_numbers = #tpu.dot_dimension_numbers<[1], [0], [0], [1], [0, 0, 1, 1], [], []>} : vector<2x16xf32>, vector<16x48xf32>, vector<2x48xf32> -> vector<2x48xf32>
    %53 = vector.broadcast %19 : vector<1x48xf32> to vector<2x48xf32>
    %54 = arith.addf %52, %53 : vector<2x48xf32>
    %55 = vector.extract_strided_slice %51 {offsets = [0, 0], sizes = [2, 16], strides = [1, 1]} : vector<2x48xf32> to vector<2x16xf32>
    %56 = vector.extract_strided_slice %54 {offsets = [0, 0], sizes = [2, 16], strides = [1, 1]} : vector<2x48xf32> to vector<2x16xf32>
    %57 = arith.addf %55, %56 : vector<2x16xf32>
    %58 = arith.negf %57 : vector<2x16xf32>
    %59 = math.exp %58 : vector<2x16xf32>
    %cst_21 = arith.constant 1.000000e+00 : f32
    %60 = vector.broadcast %cst_21 : f32 to vector<2x16xf32>
    %61 = arith.addf %60, %59 : vector<2x16xf32>
    %62 = arith.divf %60, %61 : vector<2x16xf32>
    %63 = vector.extract_strided_slice %51 {offsets = [0, 16], sizes = [2, 16], strides = [1, 1]} : vector<2x48xf32> to vector<2x16xf32>
    %64 = vector.extract_strided_slice %54 {offsets = [0, 16], sizes = [2, 16], strides = [1, 1]} : vector<2x48xf32> to vector<2x16xf32>
    %65 = arith.addf %63, %64 : vector<2x16xf32>
    %66 = arith.negf %65 : vector<2x16xf32>
    %67 = math.exp %66 : vector<2x16xf32>
    %cst_22 = arith.constant 1.000000e+00 : f32
    %68 = vector.broadcast %cst_22 : f32 to vector<2x16xf32>
    %69 = arith.addf %68, %67 : vector<2x16xf32>
    %70 = arith.divf %68, %69 : vector<2x16xf32>
    %71 = vector.extract_strided_slice %51 {offsets = [0, 32], sizes = [2, 16], strides = [1, 1]} : vector<2x48xf32> to vector<2x16xf32>
    %72 = vector.extract_strided_slice %54 {offsets = [0, 32], sizes = [2, 16], strides = [1, 1]} : vector<2x48xf32> to vector<2x16xf32>
    %73 = arith.mulf %62, %72 : vector<2x16xf32>
    %74 = arith.addf %71, %73 : vector<2x16xf32>
    %75 = math.tanh %74 : vector<2x16xf32>
    %cst_23 = arith.constant 1.000000e+00 : f32
    %76 = vector.broadcast %cst_23 : f32 to vector<2x16xf32>
    %77 = arith.subf %76, %70 : vector<2x16xf32>
    %78 = arith.mulf %77, %75 : vector<2x16xf32>
    %79 = arith.mulf %70, %50 : vector<2x16xf32>
    %80 = arith.addf %78, %79 : vector<2x16xf32>
    %81 = vector.extract_strided_slice %17 {offsets = [0, 96], sizes = [2, 48], strides = [1, 1]} : vector<2x336xf32> to vector<2x48xf32>
    %cst_24 = arith.constant dense<0.000000e+00> : vector<2x48xf32>
    %82 = tpu.matmul %80, %18, %cst_24 {dimension_numbers = #tpu.dot_dimension_numbers<[1], [0], [0], [1], [0, 0, 1, 1], [], []>} : vector<2x16xf32>, vector<16x48xf32>, vector<2x48xf32> -> vector<2x48xf32>
    %83 = vector.broadcast %19 : vector<1x48xf32> to vector<2x48xf32>
    %84 = arith.addf %82, %83 : vector<2x48xf32>
    %85 = vector.extract_strided_slice %81 {offsets = [0, 0], sizes = [2, 16], strides = [1, 1]} : vector<2x48xf32> to vector<2x16xf32>
    %86 = vector.extract_strided_slice %84 {offsets = [0, 0], sizes = [2, 16], strides = [1, 1]} : vector<2x48xf32> to vector<2x16xf32>
    %87 = arith.addf %85, %86 : vector<2x16xf32>
    %88 = arith.negf %87 : vector<2x16xf32>
    %89 = math.exp %88 : vector<2x16xf32>
    %cst_25 = arith.constant 1.000000e+00 : f32
    %90 = vector.broadcast %cst_25 : f32 to vector<2x16xf32>
    %91 = arith.addf %90, %89 : vector<2x16xf32>
    %92 = arith.divf %90, %91 : vector<2x16xf32>
    %93 = vector.extract_strided_slice %81 {offsets = [0, 16], sizes = [2, 16], strides = [1, 1]} : vector<2x48xf32> to vector<2x16xf32>
    %94 = vector.extract_strided_slice %84 {offsets = [0, 16], sizes = [2, 16], strides = [1, 1]} : vector<2x48xf32> to vector<2x16xf32>
    %95 = arith.addf %93, %94 : vector<2x16xf32>
    %96 = arith.negf %95 : vector<2x16xf32>
    %97 = math.exp %96 : vector<2x16xf32>
    %cst_26 = arith.constant 1.000000e+00 : f32
    %98 = vector.broadcast %cst_26 : f32 to vector<2x16xf32>
    %99 = arith.addf %98, %97 : vector<2x16xf32>
    %100 = arith.divf %98, %99 : vector<2x16xf32>
    %101 = vector.extract_strided_slice %81 {offsets = [0, 32], sizes = [2, 16], strides = [1, 1]} : vector<2x48xf32> to vector<2x16xf32>
    %102 = vector.extract_strided_slice %84 {offsets = [0, 32], sizes = [2, 16], strides = [1, 1]} : vector<2x48xf32> to vector<2x16xf32>
    %103 = arith.mulf %92, %102 : vector<2x16xf32>
    %104 = arith.addf %101, %103 : vector<2x16xf32>
    %105 = math.tanh %104 : vector<2x16xf32>
    %cst_27 = arith.constant 1.000000e+00 : f32
    %106 = vector.broadcast %cst_27 : f32 to vector<2x16xf32>
    %107 = arith.subf %106, %100 : vector<2x16xf32>
    %108 = arith.mulf %107, %105 : vector<2x16xf32>
    %109 = arith.mulf %100, %80 : vector<2x16xf32>
    %110 = arith.addf %108, %109 : vector<2x16xf32>
    %111 = vector.extract_strided_slice %17 {offsets = [0, 144], sizes = [2, 48], strides = [1, 1]} : vector<2x336xf32> to vector<2x48xf32>
    %cst_28 = arith.constant dense<0.000000e+00> : vector<2x48xf32>
    %112 = tpu.matmul %110, %18, %cst_28 {dimension_numbers = #tpu.dot_dimension_numbers<[1], [0], [0], [1], [0, 0, 1, 1], [], []>} : vector<2x16xf32>, vector<16x48xf32>, vector<2x48xf32> -> vector<2x48xf32>
    %113 = vector.broadcast %19 : vector<1x48xf32> to vector<2x48xf32>
    %114 = arith.addf %112, %113 : vector<2x48xf32>
    %115 = vector.extract_strided_slice %111 {offsets = [0, 0], sizes = [2, 16], strides = [1, 1]} : vector<2x48xf32> to vector<2x16xf32>
    %116 = vector.extract_strided_slice %114 {offsets = [0, 0], sizes = [2, 16], strides = [1, 1]} : vector<2x48xf32> to vector<2x16xf32>
    %117 = arith.addf %115, %116 : vector<2x16xf32>
    %118 = arith.negf %117 : vector<2x16xf32>
    %119 = math.exp %118 : vector<2x16xf32>
    %cst_29 = arith.constant 1.000000e+00 : f32
    %120 = vector.broadcast %cst_29 : f32 to vector<2x16xf32>
    %121 = arith.addf %120, %119 : vector<2x16xf32>
    %122 = arith.divf %120, %121 : vector<2x16xf32>
    %123 = vector.extract_strided_slice %111 {offsets = [0, 16], sizes = [2, 16], strides = [1, 1]} : vector<2x48xf32> to vector<2x16xf32>
    %124 = vector.extract_strided_slice %114 {offsets = [0, 16], sizes = [2, 16], strides = [1, 1]} : vector<2x48xf32> to vector<2x16xf32>
    %125 = arith.addf %123, %124 : vector<2x16xf32>
    %126 = arith.negf %125 : vector<2x16xf32>
    %127 = math.exp %126 : vector<2x16xf32>
    %cst_30 = arith.constant 1.000000e+00 : f32
    %128 = vector.broadcast %cst_30 : f32 to vector<2x16xf32>
    %129 = arith.addf %128, %127 : vector<2x16xf32>
    %130 = arith.divf %128, %129 : vector<2x16xf32>
    %131 = vector.extract_strided_slice %111 {offsets = [0, 32], sizes = [2, 16], strides = [1, 1]} : vector<2x48xf32> to vector<2x16xf32>
    %132 = vector.extract_strided_slice %114 {offsets = [0, 32], sizes = [2, 16], strides = [1, 1]} : vector<2x48xf32> to vector<2x16xf32>
    %133 = arith.mulf %122, %132 : vector<2x16xf32>
    %134 = arith.addf %131, %133 : vector<2x16xf32>
    %135 = math.tanh %134 : vector<2x16xf32>
    %cst_31 = arith.constant 1.000000e+00 : f32
    %136 = vector.broadcast %cst_31 : f32 to vector<2x16xf32>
    %137 = arith.subf %136, %130 : vector<2x16xf32>
    %138 = arith.mulf %137, %135 : vector<2x16xf32>
    %139 = arith.mulf %130, %110 : vector<2x16xf32>
    %140 = arith.addf %138, %139 : vector<2x16xf32>
    %141 = vector.extract_strided_slice %17 {offsets = [0, 192], sizes = [2, 48], strides = [1, 1]} : vector<2x336xf32> to vector<2x48xf32>
    %cst_32 = arith.constant dense<0.000000e+00> : vector<2x48xf32>
    %142 = tpu.matmul %140, %18, %cst_32 {dimension_numbers = #tpu.dot_dimension_numbers<[1], [0], [0], [1], [0, 0, 1, 1], [], []>} : vector<2x16xf32>, vector<16x48xf32>, vector<2x48xf32> -> vector<2x48xf32>
    %143 = vector.broadcast %19 : vector<1x48xf32> to vector<2x48xf32>
    %144 = arith.addf %142, %143 : vector<2x48xf32>
    %145 = vector.extract_strided_slice %141 {offsets = [0, 0], sizes = [2, 16], strides = [1, 1]} : vector<2x48xf32> to vector<2x16xf32>
    %146 = vector.extract_strided_slice %144 {offsets = [0, 0], sizes = [2, 16], strides = [1, 1]} : vector<2x48xf32> to vector<2x16xf32>
    %147 = arith.addf %145, %146 : vector<2x16xf32>
    %148 = arith.negf %147 : vector<2x16xf32>
    %149 = math.exp %148 : vector<2x16xf32>
    %cst_33 = arith.constant 1.000000e+00 : f32
    %150 = vector.broadcast %cst_33 : f32 to vector<2x16xf32>
    %151 = arith.addf %150, %149 : vector<2x16xf32>
    %152 = arith.divf %150, %151 : vector<2x16xf32>
    %153 = vector.extract_strided_slice %141 {offsets = [0, 16], sizes = [2, 16], strides = [1, 1]} : vector<2x48xf32> to vector<2x16xf32>
    %154 = vector.extract_strided_slice %144 {offsets = [0, 16], sizes = [2, 16], strides = [1, 1]} : vector<2x48xf32> to vector<2x16xf32>
    %155 = arith.addf %153, %154 : vector<2x16xf32>
    %156 = arith.negf %155 : vector<2x16xf32>
    %157 = math.exp %156 : vector<2x16xf32>
    %cst_34 = arith.constant 1.000000e+00 : f32
    %158 = vector.broadcast %cst_34 : f32 to vector<2x16xf32>
    %159 = arith.addf %158, %157 : vector<2x16xf32>
    %160 = arith.divf %158, %159 : vector<2x16xf32>
    %161 = vector.extract_strided_slice %141 {offsets = [0, 32], sizes = [2, 16], strides = [1, 1]} : vector<2x48xf32> to vector<2x16xf32>
    %162 = vector.extract_strided_slice %144 {offsets = [0, 32], sizes = [2, 16], strides = [1, 1]} : vector<2x48xf32> to vector<2x16xf32>
    %163 = arith.mulf %152, %162 : vector<2x16xf32>
    %164 = arith.addf %161, %163 : vector<2x16xf32>
    %165 = math.tanh %164 : vector<2x16xf32>
    %cst_35 = arith.constant 1.000000e+00 : f32
    %166 = vector.broadcast %cst_35 : f32 to vector<2x16xf32>
    %167 = arith.subf %166, %160 : vector<2x16xf32>
    %168 = arith.mulf %167, %165 : vector<2x16xf32>
    %169 = arith.mulf %160, %140 : vector<2x16xf32>
    %170 = arith.addf %168, %169 : vector<2x16xf32>
    %171 = vector.extract_strided_slice %17 {offsets = [0, 240], sizes = [2, 48], strides = [1, 1]} : vector<2x336xf32> to vector<2x48xf32>
    %cst_36 = arith.constant dense<0.000000e+00> : vector<2x48xf32>
    %172 = tpu.matmul %170, %18, %cst_36 {dimension_numbers = #tpu.dot_dimension_numbers<[1], [0], [0], [1], [0, 0, 1, 1], [], []>} : vector<2x16xf32>, vector<16x48xf32>, vector<2x48xf32> -> vector<2x48xf32>
    %173 = vector.broadcast %19 : vector<1x48xf32> to vector<2x48xf32>
    %174 = arith.addf %172, %173 : vector<2x48xf32>
    %175 = vector.extract_strided_slice %171 {offsets = [0, 0], sizes = [2, 16], strides = [1, 1]} : vector<2x48xf32> to vector<2x16xf32>
    %176 = vector.extract_strided_slice %174 {offsets = [0, 0], sizes = [2, 16], strides = [1, 1]} : vector<2x48xf32> to vector<2x16xf32>
    %177 = arith.addf %175, %176 : vector<2x16xf32>
    %178 = arith.negf %177 : vector<2x16xf32>
    %179 = math.exp %178 : vector<2x16xf32>
    %cst_37 = arith.constant 1.000000e+00 : f32
    %180 = vector.broadcast %cst_37 : f32 to vector<2x16xf32>
    %181 = arith.addf %180, %179 : vector<2x16xf32>
    %182 = arith.divf %180, %181 : vector<2x16xf32>
    %183 = vector.extract_strided_slice %171 {offsets = [0, 16], sizes = [2, 16], strides = [1, 1]} : vector<2x48xf32> to vector<2x16xf32>
    %184 = vector.extract_strided_slice %174 {offsets = [0, 16], sizes = [2, 16], strides = [1, 1]} : vector<2x48xf32> to vector<2x16xf32>
    %185 = arith.addf %183, %184 : vector<2x16xf32>
    %186 = arith.negf %185 : vector<2x16xf32>
    %187 = math.exp %186 : vector<2x16xf32>
    %cst_38 = arith.constant 1.000000e+00 : f32
    %188 = vector.broadcast %cst_38 : f32 to vector<2x16xf32>
    %189 = arith.addf %188, %187 : vector<2x16xf32>
    %190 = arith.divf %188, %189 : vector<2x16xf32>
    %191 = vector.extract_strided_slice %171 {offsets = [0, 32], sizes = [2, 16], strides = [1, 1]} : vector<2x48xf32> to vector<2x16xf32>
    %192 = vector.extract_strided_slice %174 {offsets = [0, 32], sizes = [2, 16], strides = [1, 1]} : vector<2x48xf32> to vector<2x16xf32>
    %193 = arith.mulf %182, %192 : vector<2x16xf32>
    %194 = arith.addf %191, %193 : vector<2x16xf32>
    %195 = math.tanh %194 : vector<2x16xf32>
    %cst_39 = arith.constant 1.000000e+00 : f32
    %196 = vector.broadcast %cst_39 : f32 to vector<2x16xf32>
    %197 = arith.subf %196, %190 : vector<2x16xf32>
    %198 = arith.mulf %197, %195 : vector<2x16xf32>
    %199 = arith.mulf %190, %170 : vector<2x16xf32>
    %200 = arith.addf %198, %199 : vector<2x16xf32>
    %c0_40 = arith.constant 0 : index
    %c0_41 = arith.constant 0 : index
    %201 = vector.load %arg7[%c0_40, %c0_41] : memref<4x12xf32, #tpu.memory_space<vmem>>, vector<4x12xf32>
    %c0_42 = arith.constant 0 : index
    %c0_43 = arith.constant 0 : index
    %202 = vector.load %arg8[%c0_42, %c0_43] : memref<1x12xf32, #tpu.memory_space<vmem>>, vector<1x12xf32>
    %cst_44 = arith.constant 0.000000e+00 : f32
    %203 = vector.broadcast %cst_44 : f32 to vector<2x4xf32>
    %204 = vector.extract_strided_slice %17 {offsets = [0, 288], sizes = [2, 12], strides = [1, 1]} : vector<2x336xf32> to vector<2x12xf32>
    %cst_45 = arith.constant dense<0.000000e+00> : vector<2x12xf32>
    %205 = tpu.matmul %203, %201, %cst_45 {dimension_numbers = #tpu.dot_dimension_numbers<[1], [0], [0], [1], [0, 0, 1, 1], [], []>} : vector<2x4xf32>, vector<4x12xf32>, vector<2x12xf32> -> vector<2x12xf32>
    %206 = vector.broadcast %202 : vector<1x12xf32> to vector<2x12xf32>
    %207 = arith.addf %205, %206 : vector<2x12xf32>
    %208 = vector.extract_strided_slice %204 {offsets = [0, 0], sizes = [2, 4], strides = [1, 1]} : vector<2x12xf32> to vector<2x4xf32>
    %209 = vector.extract_strided_slice %207 {offsets = [0, 0], sizes = [2, 4], strides = [1, 1]} : vector<2x12xf32> to vector<2x4xf32>
    %210 = arith.addf %208, %209 : vector<2x4xf32>
    %211 = arith.negf %210 : vector<2x4xf32>
    %212 = math.exp %211 : vector<2x4xf32>
    %cst_46 = arith.constant 1.000000e+00 : f32
    %213 = vector.broadcast %cst_46 : f32 to vector<2x4xf32>
    %214 = arith.addf %213, %212 : vector<2x4xf32>
    %215 = arith.divf %213, %214 : vector<2x4xf32>
    %216 = vector.extract_strided_slice %204 {offsets = [0, 4], sizes = [2, 4], strides = [1, 1]} : vector<2x12xf32> to vector<2x4xf32>
    %217 = vector.extract_strided_slice %207 {offsets = [0, 4], sizes = [2, 4], strides = [1, 1]} : vector<2x12xf32> to vector<2x4xf32>
    %218 = arith.addf %216, %217 : vector<2x4xf32>
    %219 = arith.negf %218 : vector<2x4xf32>
    %220 = math.exp %219 : vector<2x4xf32>
    %cst_47 = arith.constant 1.000000e+00 : f32
    %221 = vector.broadcast %cst_47 : f32 to vector<2x4xf32>
    %222 = arith.addf %221, %220 : vector<2x4xf32>
    %223 = arith.divf %221, %222 : vector<2x4xf32>
    %224 = vector.extract_strided_slice %204 {offsets = [0, 8], sizes = [2, 4], strides = [1, 1]} : vector<2x12xf32> to vector<2x4xf32>
    %225 = vector.extract_strided_slice %207 {offsets = [0, 8], sizes = [2, 4], strides = [1, 1]} : vector<2x12xf32> to vector<2x4xf32>
    %226 = arith.mulf %215, %225 : vector<2x4xf32>
    %227 = arith.addf %224, %226 : vector<2x4xf32>
    %228 = math.tanh %227 : vector<2x4xf32>
    %cst_48 = arith.constant 1.000000e+00 : f32
    %229 = vector.broadcast %cst_48 : f32 to vector<2x4xf32>
    %230 = arith.subf %229, %223 : vector<2x4xf32>
    %231 = arith.mulf %230, %228 : vector<2x4xf32>
    %232 = arith.mulf %223, %203 : vector<2x4xf32>
    %233 = arith.addf %231, %232 : vector<2x4xf32>
    %234 = vector.extract_strided_slice %17 {offsets = [0, 312], sizes = [2, 12], strides = [1, 1]} : vector<2x336xf32> to vector<2x12xf32>
    %cst_49 = arith.constant dense<0.000000e+00> : vector<2x12xf32>
    %235 = tpu.matmul %233, %201, %cst_49 {dimension_numbers = #tpu.dot_dimension_numbers<[1], [0], [0], [1], [0, 0, 1, 1], [], []>} : vector<2x4xf32>, vector<4x12xf32>, vector<2x12xf32> -> vector<2x12xf32>
    %236 = vector.broadcast %202 : vector<1x12xf32> to vector<2x12xf32>
    %237 = arith.addf %235, %236 : vector<2x12xf32>
    %238 = vector.extract_strided_slice %234 {offsets = [0, 0], sizes = [2, 4], strides = [1, 1]} : vector<2x12xf32> to vector<2x4xf32>
    %239 = vector.extract_strided_slice %237 {offsets = [0, 0], sizes = [2, 4], strides = [1, 1]} : vector<2x12xf32> to vector<2x4xf32>
    %240 = arith.addf %238, %239 : vector<2x4xf32>
    %241 = arith.negf %240 : vector<2x4xf32>
    %242 = math.exp %241 : vector<2x4xf32>
    %cst_50 = arith.constant 1.000000e+00 : f32
    %243 = vector.broadcast %cst_50 : f32 to vector<2x4xf32>
    %244 = arith.addf %243, %242 : vector<2x4xf32>
    %245 = arith.divf %243, %244 : vector<2x4xf32>
    %246 = vector.extract_strided_slice %234 {offsets = [0, 4], sizes = [2, 4], strides = [1, 1]} : vector<2x12xf32> to vector<2x4xf32>
    %247 = vector.extract_strided_slice %237 {offsets = [0, 4], sizes = [2, 4], strides = [1, 1]} : vector<2x12xf32> to vector<2x4xf32>
    %248 = arith.addf %246, %247 : vector<2x4xf32>
    %249 = arith.negf %248 : vector<2x4xf32>
    %250 = math.exp %249 : vector<2x4xf32>
    %cst_51 = arith.constant 1.000000e+00 : f32
    %251 = vector.broadcast %cst_51 : f32 to vector<2x4xf32>
    %252 = arith.addf %251, %250 : vector<2x4xf32>
    %253 = arith.divf %251, %252 : vector<2x4xf32>
    %254 = vector.extract_strided_slice %234 {offsets = [0, 8], sizes = [2, 4], strides = [1, 1]} : vector<2x12xf32> to vector<2x4xf32>
    %255 = vector.extract_strided_slice %237 {offsets = [0, 8], sizes = [2, 4], strides = [1, 1]} : vector<2x12xf32> to vector<2x4xf32>
    %256 = arith.mulf %245, %255 : vector<2x4xf32>
    %257 = arith.addf %254, %256 : vector<2x4xf32>
    %258 = math.tanh %257 : vector<2x4xf32>
    %cst_52 = arith.constant 1.000000e+00 : f32
    %259 = vector.broadcast %cst_52 : f32 to vector<2x4xf32>
    %260 = arith.subf %259, %253 : vector<2x4xf32>
    %261 = arith.mulf %260, %258 : vector<2x4xf32>
    %262 = arith.mulf %253, %233 : vector<2x4xf32>
    %263 = arith.addf %261, %262 : vector<2x4xf32>
    %cst_53 = arith.constant 0.000000e+00 : f32
    %264 = vector.broadcast %cst_53 : f32 to vector<2x4xf32>
    %265 = vector.extract_strided_slice %17 {offsets = [0, 300], sizes = [2, 12], strides = [1, 1]} : vector<2x336xf32> to vector<2x12xf32>
    %cst_54 = arith.constant dense<0.000000e+00> : vector<2x12xf32>
    %266 = tpu.matmul %264, %201, %cst_54 {dimension_numbers = #tpu.dot_dimension_numbers<[1], [0], [0], [1], [0, 0, 1, 1], [], []>} : vector<2x4xf32>, vector<4x12xf32>, vector<2x12xf32> -> vector<2x12xf32>
    %267 = vector.broadcast %202 : vector<1x12xf32> to vector<2x12xf32>
    %268 = arith.addf %266, %267 : vector<2x12xf32>
    %269 = vector.extract_strided_slice %265 {offsets = [0, 0], sizes = [2, 4], strides = [1, 1]} : vector<2x12xf32> to vector<2x4xf32>
    %270 = vector.extract_strided_slice %268 {offsets = [0, 0], sizes = [2, 4], strides = [1, 1]} : vector<2x12xf32> to vector<2x4xf32>
    %271 = arith.addf %269, %270 : vector<2x4xf32>
    %272 = arith.negf %271 : vector<2x4xf32>
    %273 = math.exp %272 : vector<2x4xf32>
    %cst_55 = arith.constant 1.000000e+00 : f32
    %274 = vector.broadcast %cst_55 : f32 to vector<2x4xf32>
    %275 = arith.addf %274, %273 : vector<2x4xf32>
    %276 = arith.divf %274, %275 : vector<2x4xf32>
    %277 = vector.extract_strided_slice %265 {offsets = [0, 4], sizes = [2, 4], strides = [1, 1]} : vector<2x12xf32> to vector<2x4xf32>
    %278 = vector.extract_strided_slice %268 {offsets = [0, 4], sizes = [2, 4], strides = [1, 1]} : vector<2x12xf32> to vector<2x4xf32>
    %279 = arith.addf %277, %278 : vector<2x4xf32>
    %280 = arith.negf %279 : vector<2x4xf32>
    %281 = math.exp %280 : vector<2x4xf32>
    %cst_56 = arith.constant 1.000000e+00 : f32
    %282 = vector.broadcast %cst_56 : f32 to vector<2x4xf32>
    %283 = arith.addf %282, %281 : vector<2x4xf32>
    %284 = arith.divf %282, %283 : vector<2x4xf32>
    %285 = vector.extract_strided_slice %265 {offsets = [0, 8], sizes = [2, 4], strides = [1, 1]} : vector<2x12xf32> to vector<2x4xf32>
    %286 = vector.extract_strided_slice %268 {offsets = [0, 8], sizes = [2, 4], strides = [1, 1]} : vector<2x12xf32> to vector<2x4xf32>
    %287 = arith.mulf %276, %286 : vector<2x4xf32>
    %288 = arith.addf %285, %287 : vector<2x4xf32>
    %289 = math.tanh %288 : vector<2x4xf32>
    %cst_57 = arith.constant 1.000000e+00 : f32
    %290 = vector.broadcast %cst_57 : f32 to vector<2x4xf32>
    %291 = arith.subf %290, %284 : vector<2x4xf32>
    %292 = arith.mulf %291, %289 : vector<2x4xf32>
    %293 = arith.mulf %284, %264 : vector<2x4xf32>
    %294 = arith.addf %292, %293 : vector<2x4xf32>
    %295 = vector.extract_strided_slice %17 {offsets = [0, 324], sizes = [2, 12], strides = [1, 1]} : vector<2x336xf32> to vector<2x12xf32>
    %cst_58 = arith.constant dense<0.000000e+00> : vector<2x12xf32>
    %296 = tpu.matmul %294, %201, %cst_58 {dimension_numbers = #tpu.dot_dimension_numbers<[1], [0], [0], [1], [0, 0, 1, 1], [], []>} : vector<2x4xf32>, vector<4x12xf32>, vector<2x12xf32> -> vector<2x12xf32>
    %297 = vector.broadcast %202 : vector<1x12xf32> to vector<2x12xf32>
    %298 = arith.addf %296, %297 : vector<2x12xf32>
    %299 = vector.extract_strided_slice %295 {offsets = [0, 0], sizes = [2, 4], strides = [1, 1]} : vector<2x12xf32> to vector<2x4xf32>
    %300 = vector.extract_strided_slice %298 {offsets = [0, 0], sizes = [2, 4], strides = [1, 1]} : vector<2x12xf32> to vector<2x4xf32>
    %301 = arith.addf %299, %300 : vector<2x4xf32>
    %302 = arith.negf %301 : vector<2x4xf32>
    %303 = math.exp %302 : vector<2x4xf32>
    %cst_59 = arith.constant 1.000000e+00 : f32
    %304 = vector.broadcast %cst_59 : f32 to vector<2x4xf32>
    %305 = arith.addf %304, %303 : vector<2x4xf32>
    %306 = arith.divf %304, %305 : vector<2x4xf32>
    %307 = vector.extract_strided_slice %295 {offsets = [0, 4], sizes = [2, 4], strides = [1, 1]} : vector<2x12xf32> to vector<2x4xf32>
    %308 = vector.extract_strided_slice %298 {offsets = [0, 4], sizes = [2, 4], strides = [1, 1]} : vector<2x12xf32> to vector<2x4xf32>
    %309 = arith.addf %307, %308 : vector<2x4xf32>
    %310 = arith.negf %309 : vector<2x4xf32>
    %311 = math.exp %310 : vector<2x4xf32>
    %cst_60 = arith.constant 1.000000e+00 : f32
    %312 = vector.broadcast %cst_60 : f32 to vector<2x4xf32>
    %313 = arith.addf %312, %311 : vector<2x4xf32>
    %314 = arith.divf %312, %313 : vector<2x4xf32>
    %315 = vector.extract_strided_slice %295 {offsets = [0, 8], sizes = [2, 4], strides = [1, 1]} : vector<2x12xf32> to vector<2x4xf32>
    %316 = vector.extract_strided_slice %298 {offsets = [0, 8], sizes = [2, 4], strides = [1, 1]} : vector<2x12xf32> to vector<2x4xf32>
    %317 = arith.mulf %306, %316 : vector<2x4xf32>
    %318 = arith.addf %315, %317 : vector<2x4xf32>
    %319 = math.tanh %318 : vector<2x4xf32>
    %cst_61 = arith.constant 1.000000e+00 : f32
    %320 = vector.broadcast %cst_61 : f32 to vector<2x4xf32>
    %321 = arith.subf %320, %314 : vector<2x4xf32>
    %322 = arith.mulf %321, %319 : vector<2x4xf32>
    %323 = arith.mulf %314, %294 : vector<2x4xf32>
    %324 = arith.addf %322, %323 : vector<2x4xf32>
    %325 = tpu.concatenate %200, %263, %324 in 1 : vector<2x16xf32>, vector<2x4xf32>, vector<2x4xf32> -> vector<2x24xf32>
    %c0_62 = arith.constant 0 : index
    %c0_63 = arith.constant 0 : index
    %326 = vector.load %arg9[%c0_62, %c0_63] : memref<24x8xf32, #tpu.memory_space<vmem>>, vector<24x8xf32>
    %cst_64 = arith.constant dense<0.000000e+00> : vector<2x8xf32>
    %327 = tpu.matmul %325, %326, %cst_64 {dimension_numbers = #tpu.dot_dimension_numbers<[1], [0], [0], [1], [0, 0, 1, 1], [], []>} : vector<2x24xf32>, vector<24x8xf32>, vector<2x8xf32> -> vector<2x8xf32>
    %c0_65 = arith.constant 0 : index
    %c0_66 = arith.constant 0 : index
    %328 = vector.load %arg10[%c0_65, %c0_66] : memref<1x8xf32, #tpu.memory_space<vmem>>, vector<1x8xf32>
    %329 = vector.broadcast %328 : vector<1x8xf32> to vector<2x8xf32>
    %330 = arith.addf %327, %329 : vector<2x8xf32>
    %331 = vector.extract_strided_slice %0 {offsets = [0, 40], sizes = [2, 24], strides = [1, 1]} : vector<2x64xf32> to vector<2x24xf32>
    %c0_67 = arith.constant 0 : index
    %c0_68 = arith.constant 0 : index
    %332 = vector.load %arg11[%c0_67, %c0_68] : memref<1x24xf32, #tpu.memory_space<vmem>>, vector<1x24xf32>
    %333 = vector.broadcast %332 : vector<1x24xf32> to vector<2x24xf32>
    %334 = arith.mulf %331, %333 : vector<2x24xf32>
    %335 = vector.extract_strided_slice %334 {offsets = [0, 0], sizes = [2, 8], strides = [1, 1]} : vector<2x24xf32> to vector<2x8xf32>
    %336 = vector.extract_strided_slice %334 {offsets = [0, 8], sizes = [2, 8], strides = [1, 1]} : vector<2x24xf32> to vector<2x8xf32>
    %337 = arith.addf %335, %336 : vector<2x8xf32>
    %338 = vector.extract_strided_slice %334 {offsets = [0, 16], sizes = [2, 8], strides = [1, 1]} : vector<2x24xf32> to vector<2x8xf32>
    %339 = arith.addf %337, %338 : vector<2x8xf32>
    %340 = arith.addf %330, %339 : vector<2x8xf32>
    %341 = arith.negf %340 : vector<2x8xf32>
    %342 = math.exp %341 : vector<2x8xf32>
    %cst_69 = arith.constant 1.000000e+00 : f32
    %343 = vector.broadcast %cst_69 : f32 to vector<2x8xf32>
    %344 = arith.addf %343, %342 : vector<2x8xf32>
    %345 = arith.divf %343, %344 : vector<2x8xf32>
    %c0_70 = arith.constant 0 : index
    %c0_71 = arith.constant 0 : index
    %346 = vector.load %arg12[%c0_70, %c0_71] : memref<2x8xf32, #tpu.memory_space<vmem>>, vector<2x8xf32>
    tpu.vector_store %arg12[%c0_70, %c0_71], %345 {strides = array<i32>} : memref<2x8xf32, #tpu.memory_space<vmem>>, vector<2x8xf32>,
    return
  }
}

</mosaic_0001>

<llo_original>
// kernel: lstnet_forward.1
$region0: #{lstnet_forward.1}
  #allocation0 [shape = 'u32[]', space=smem, size = 0x4, offset = 0x4, fixed_abs, tag = 'smem constant byte address 0x4 - core index']
  #allocation1 [shape = 'u32[144,128]{1,0:T(1,128)}', space=vmem, size = 0x12000, scoped, tag = 'internal scratch']
  %s0 = inlined_call_operand.vmem [shape: f32[2,64], index: 0, kind: input, shape index: {}]
  %s1 = inlined_call_operand.vmem [shape: f32[64,72], index: 1, kind: input, shape index: {}]
  %s2 = inlined_call_operand.vmem [shape: f32[1,72], index: 2, kind: input, shape index: {}]
  %s3 = inlined_call_operand.vmem [shape: f32[24,336], index: 3, kind: input, shape index: {}]
  %s4 = inlined_call_operand.vmem [shape: f32[1,336], index: 4, kind: input, shape index: {}]
  %s5 = inlined_call_operand.vmem [shape: f32[16,48], index: 5, kind: input, shape index: {}]
  %s6 = inlined_call_operand.vmem [shape: f32[1,48], index: 6, kind: input, shape index: {}]
  %s7 = inlined_call_operand.vmem [shape: f32[4,12], index: 7, kind: input, shape index: {}]
  %s8 = inlined_call_operand.vmem [shape: f32[1,12], index: 8, kind: input, shape index: {}]
  %s9 = inlined_call_operand.vmem [shape: f32[24,8], index: 9, kind: input, shape index: {}]
  %s10 = inlined_call_operand.vmem [shape: f32[1,8], index: 10, kind: input, shape index: {}]
  %s11 = inlined_call_operand.vmem [shape: f32[1,24], index: 11, kind: input, shape index: {}]
  %s12 = inlined_call_operand.vmem [shape: f32[2,8], index: 12, kind: output, shape index: {}]
  %s13 = sld [smem:[#allocation0]]
  $region58: #{lstnet_forward.1} parent=0
    _
  %s15 = ssub.s32 1, %s13
  %s16 = scalar_select 0, %s15, %s13
  // Predicated region
  $region2: #{lstnet_forward.1} parent=0 // pred_check
    _
  $region3: #{lstnet_forward.1} parent=0 // pred_check_branch
    %18 = sbr.rel (0) target = $region5
  $region4: #{lstnet_forward.1} parent=0 // pred_region
    _
  $region5: #{lstnet_forward.1} parent=0 // pred_fallthru
    _
  // Predicated region
  $region6: #{lstnet_forward.1} parent=0 // pred_check
    _
  $region7: #{lstnet_forward.1} parent=0 // pred_check_branch
    %20 = sbr.rel (0) target = $region9
  $region8: #{lstnet_forward.1} parent=0 // pred_region
    _
  $region9: #{lstnet_forward.1} parent=0 // pred_fallthru
    _
  // Predicated region
  $region10: #{lstnet_forward.1} parent=0 // pred_check
    _
  $region11: #{lstnet_forward.1} parent=0 // pred_check_branch
    %22 = sbr.rel (0) target = $region13
  $region12: #{lstnet_forward.1} parent=0 // pred_region
    _
  $region13: #{lstnet_forward.1} parent=0 // pred_fallthru
    _
  // Predicated region
  $region14: #{lstnet_forward.1} parent=0 // pred_check
    _
  $region15: #{lstnet_forward.1} parent=0 // pred_check_branch
    %24 = sbr.rel (0) target = $region17
  $region16: #{lstnet_forward.1} parent=0 // pred_region
    _
  $region17: #{lstnet_forward.1} parent=0 // pred_fallthru
    _
  // Predicated region
  $region18: #{lstnet_forward.1} parent=0 // pred_check
    _
  $region19: #{lstnet_forward.1} parent=0 // pred_check_branch
    %26 = sbr.rel (0) target = $region21
  $region20: #{lstnet_forward.1} parent=0 // pred_region
    _
  $region21: #{lstnet_forward.1} parent=0 // pred_fallthru
    _
  // Predicated region
  $region22: #{lstnet_forward.1} parent=0 // pred_check
    _
  $region23: #{lstnet_forward.1} parent=0 // pred_check_branch
    %28 = sbr.rel (0) target = $region25
  $region24: #{lstnet_forward.1} parent=0 // pred_region
    _
  $region25: #{lstnet_forward.1} parent=0 // pred_fallthru
    _
  // Predicated region
  $region26: #{lstnet_forward.1} parent=0 // pred_check
    _
  $region27: #{lstnet_forward.1} parent=0 // pred_check_branch
    %30 = sbr.rel (0) target = $region29
  $region28: #{lstnet_forward.1} parent=0 // pred_region
    _
  $region29: #{lstnet_forward.1} parent=0 // pred_fallthru
    _
  // Predicated region
  $region30: #{lstnet_forward.1} parent=0 // pred_check
    _
  $region31: #{lstnet_forward.1} parent=0 // pred_check_branch
    %32 = sbr.rel (0) target = $region33
  $region32: #{lstnet_forward.1} parent=0 // pred_region
    _
  $region33: #{lstnet_forward.1} parent=0 // pred_fallthru
    _
  // Predicated region
  $region34: #{lstnet_forward.1} parent=0 // pred_check
    _
  $region35: #{lstnet_forward.1} parent=0 // pred_check_branch
    %34 = sbr.rel (0) target = $region37
  $region36: #{lstnet_forward.1} parent=0 // pred_region
    _
  $region37: #{lstnet_forward.1} parent=0 // pred_fallthru
    _
  // Predicated region
  $region38: #{lstnet_forward.1} parent=0 // pred_check
    _
  $region39: #{lstnet_forward.1} parent=0 // pred_check_branch
    %36 = sbr.rel (0) target = $region41
  $region40: #{lstnet_forward.1} parent=0 // pred_region
    _
  $region41: #{lstnet_forward.1} parent=0 // pred_fallthru
    _
  // Predicated region
  $region42: #{lstnet_forward.1} parent=0 // pred_check
    _
  $region43: #{lstnet_forward.1} parent=0 // pred_check_branch
    %38 = sbr.rel (0) target = $region45
  $region44: #{lstnet_forward.1} parent=0 // pred_region
    _
  $region45: #{lstnet_forward.1} parent=0 // pred_fallthru
    _
  // Predicated region
  $region46: #{lstnet_forward.1} parent=0 // pred_check
    _
  $region47: #{lstnet_forward.1} parent=0 // pred_check_branch
    %40 = sbr.rel (0) target = $region49
  $region48: #{lstnet_forward.1} parent=0 // pred_region
    _
  $region49: #{lstnet_forward.1} parent=0 // pred_fallthru
    _
  %v41 = vld [vmem:[%s0] sm:$0x3]
  %v42 = vld [vmem:[%s1] sm:$0xff]
  %v43 = vld [vmem:[%s1 + $0x8] sm:$0xff]
  %v44 = vld [vmem:[%s1 + $0x10] sm:$0xff]
  %v45 = vld [vmem:[%s1 + $0x18] sm:$0xff]
  %v46 = vld [vmem:[%s1 + $0x20] sm:$0xff]
  %v47 = vld [vmem:[%s1 + $0x28] sm:$0xff]
  %v48 = vld [vmem:[%s1 + $0x30] sm:$0xff]
  %v49 = vld [vmem:[%s1 + $0x38] sm:$0xff]
  %v50 = vld [vmem:[%s2] sm:$0x1]
  %v52 = vlaneseq
  %v53 = vshrl.u32 %v52, 7
  %v54 = vsub.s32 0, %v53
  %v55 = vrot.slane %v50, %v54
  %vm57 = vcmask 523264
  %v59 = vsel %vm57, %v41, 0
  %61 = vmatprep.subr.mxu0 0.0
  %62 = vmatpush1.msra.mxu0 %v42
  %63 = vmatprep.subr.mxu0 0.0
  %64 = vmatpush1.msra.mxu0 %v43
  %65 = vmatprep.subr.mxu0 0.0
  %66 = vmatpush1.msra.mxu0 %v44
  %67 = vmatprep.subr.mxu0 0.0
  %68 = vmatpush1.msra.mxu0 %v45
  %69 = vmatprep.subr.mxu0 0.0
  %70 = vmatpush1.msra.mxu0 %v46
  %71 = vmatprep.subr.mxu0 0.0
  %72 = vmatpush1.msra.mxu0 %v47
  %73 = vmatprep.subr.mxu0 0.0
  %74 = vmatpush1.msra.mxu0 %v48
  %75 = vmatprep.subr.mxu0 0.0
  %76 = vmatpush1.msra.mxu0 %v49
  %77 = vmatprep.subr.mxu0 0.0
  %78 = vmatpush1.msra.mxu0 0.0
  %79 = vmatprep.subr.mxu0 0.0
  %80 = vmatpush1.msra.mxu0 0.0
  %81 = vmatprep.subr.mxu0 0.0
  %82 = vmatpush1.msra.mxu0 0.0
  %83 = vmatprep.subr.mxu0 0.0
  %84 = vmatpush1.msra.mxu0 0.0
  %85 = vmatprep.subr.mxu0 0.0
  %86 = vmatpush1.msra.mxu0 0.0
  %87 = vmatprep.subr.mxu0 0.0
  %88 = vmatpush1.msra.mxu0 0.0
  %89 = vmatprep.subr.mxu0 0.0
  %90 = vmatpush1.msra.mxu0 0.0
  %91 = vmatprep.subr.mxu0 0.0
  %92 = vmatpush1.msra.mxu0 0.0
  %93 = vmatprep.subr.mxu0 0.0
  %94 = vmatpush1.msra.mxu0 0.0
  %95 = vmatprep.subr.mxu0 0.0
  %96 = vmatpush1.msra.mxu0 0.0
  %97 = vmatprep.subr.mxu0 0.0
  %98 = vmatpush1.msra.mxu0 0.0
  %99 = vmatprep.subr.mxu0 0.0
  %100 = vmatpush1.msra.mxu0 0.0
  %101 = vmatprep.subr.mxu0 0.0
  %102 = vmatpush1.msra.mxu0 0.0
  %103 = vmatprep.subr.mxu0 0.0
  %104 = vmatpush1.msra.mxu0 0.0
  %105 = vmatprep.subr.mxu0 0.0
  %106 = vmatpush1.msra.mxu0 0.0
  %107 = vmatprep.subr.mxu0 0.0
  %108 = vmatpush1.msra.mxu0 0.0
  %109 = vmatprep.subr.mxu0 0.0
  %110 = vmatpush1.msra.mxu0 0.0
  %111 = vmatprep.subr.mxu0 0.0
  %112 = vmatpush1.msra.mxu0 0.0
  %113 = vmatprep.subr.mxu0 0.0
  %114 = vmatpush1.msra.mxu0 0.0
  %115 = vmatprep.subr.mxu0 0.0
  %116 = vmatpush1.msra.mxu0 0.0
  %117 = vmatprep.subr.mxu0 0.0
  %118 = vmatpush1.msra.mxu0 0.0
  %119 = vmatprep.subr.mxu0 0.0
  %120 = vmatpush1.msra.mxu0 0.0
  %121 = vmatprep.subr.mxu0 0.0
  %122 = vmatpush1.msra.mxu0 0.0
  %123 = vmatprep.subr.mxu0 0.0
  %124 = vmatpush1.msra.mxu0 0.0
  %125 = vmatprep.mubr.f32.mxu0 0.0
  %126 = vmatmul.mubr.f32.gmra.mrb[0].mxu0 %v59
  %v127 = vpop.f32.mrb[0].mxu0
  %v128 = vadd.f32 %v55, %v127
  %v129 = vpop.f32.mrb[0].mxu0
  %130 = vdwg.mxu0
  %v131 = vmax.f32 %v128, 0.0
  %133 = vrot.lane.b32.xlu0 %v131, 104
  %v134 = vpop.permute.xlu0 %133
  %v136 = vadd.f32 %v131, %v134
  %137 = vrot.lane.b32.xlu0 %v131, 80
  %v138 = vpop.permute.xlu0 %137
  %v140 = vadd.f32 %v136, %v138
  %v141 = vld [vmem:[%s3] sm:$0xff]
  %v142 = vld [vmem:[%s3 + $0x8] sm:$0xff]
  %v143 = vld [vmem:[%s3 + $0x10] sm:$0xff]
  %v144 = vld [vmem:[%s3 + $0x18] sm:$0xff]
  %v145 = vld [vmem:[%s3 + $0x20] sm:$0xff]
  %v146 = vld [vmem:[%s3 + $0x28] sm:$0xff]
  %v147 = vld [vmem:[%s3 + $0x30] sm:$0xff]
  %v148 = vld [vmem:[%s3 + $0x38] sm:$0xff]
  %v149 = vld [vmem:[%s3 + $0x40] sm:$0xff]
  %v150 = vld [vmem:[%s4] sm:$0x7]
  %v152 = vlaneseq
  %v153 = vshrl.u32 %v152, 7
  %v154 = vsub.s32 0, %v153
  %v155 = vrot.slane %v150, %v154
  %v156 = vlaneseq
  %v157 = vshrl.u32 %v156, 7
  %v158 = vsub.s32 1, %v157
  %v159 = vrot.slane %v150, %v158
  %v160 = vlaneseq
  %v161 = vshrl.u32 %v160, 7
  %v162 = vsub.s32 2, %v161
  %v163 = vrot.slane %v150, %v162
  %vm167 = vcmask 195584
  %v169 = vsel %vm167, %v140, 0
  %171 = vmatprep.subr.mxu0 %v142
  %172 = vmatpush1.msra.mxu0 %v141
  %173 = vmatprep.subr.mxu0 %v145
  %174 = vmatpush1.msra.mxu0 %v144
  %175 = vmatprep.subr.mxu0 %v148
  %176 = vmatpush1.msra.mxu0 %v147
  %177 = vmatprep.subr.mxu0 0.0
  %178 = vmatpush1.msra.mxu0 0.0
  %179 = vmatprep.subr.mxu0 0.0
  %180 = vmatpush1.msra.mxu0 0.0
  %181 = vmatprep.subr.mxu0 0.0
  %182 = vmatpush1.msra.mxu0 0.0
  %183 = vmatprep.subr.mxu0 0.0
  %184 = vmatpush1.msra.mxu0 0.0
  %185 = vmatprep.subr.mxu0 0.0
  %186 = vmatpush1.msra.mxu0 0.0
  %187 = vmatprep.subr.mxu0 0.0
  %188 = vmatpush1.msra.mxu0 0.0
  %189 = vmatprep.subr.mxu0 0.0
  %190 = vmatpush1.msra.mxu0 0.0
  %191 = vmatprep.subr.mxu0 0.0
  %192 = vmatpush1.msra.mxu0 0.0
  %193 = vmatprep.subr.mxu0 0.0
  %194 = vmatpush1.msra.mxu0 0.0
  %195 = vmatprep.subr.mxu0 0.0
  %196 = vmatpush1.msra.mxu0 0.0
  %197 = vmatprep.subr.mxu0 0.0
  %198 = vmatpush1.msra.mxu0 0.0
  %199 = vmatprep.subr.mxu0 0.0
  %200 = vmatpush1.msra.mxu0 0.0
  %201 = vmatprep.subr.mxu0 0.0
  %202 = vmatpush1.msra.mxu0 0.0
  %203 = vmatprep.subr.mxu0 0.0
  %204 = vmatpush1.msra.mxu0 0.0
  %205 = vmatprep.subr.mxu0 0.0
  %206 = vmatpush1.msra.mxu0 0.0
  %207 = vmatprep.subr.mxu0 0.0
  %208 = vmatpush1.msra.mxu0 0.0
  %209 = vmatprep.subr.mxu0 0.0
  %210 = vmatpush1.msra.mxu0 0.0
  %211 = vmatprep.subr.mxu0 0.0
  %212 = vmatpush1.msra.mxu0 0.0
  %213 = vmatprep.subr.mxu0 0.0
  %214 = vmatpush1.msra.mxu0 0.0
  %215 = vmatprep.subr.mxu0 0.0
  %216 = vmatpush1.msra.mxu0 0.0
  %217 = vmatprep.subr.mxu0 0.0
  %218 = vmatpush1.msra.mxu0 0.0
  %219 = vmatprep.subr.mxu0 0.0
  %220 = vmatpush1.msra.mxu0 0.0
  %221 = vmatprep.subr.mxu0 0.0
  %222 = vmatpush1.msra.mxu0 0.0
  %223 = vmatprep.subr.mxu0 0.0
  %224 = vmatpush1.msra.mxu0 0.0
  %225 = vmatprep.subr.mxu0 0.0
  %226 = vmatpush1.msra.mxu0 0.0
  %227 = vmatprep.subr.mxu0 0.0
  %228 = vmatpush1.msra.mxu0 0.0
  %229 = vmatprep.subr.mxu0 0.0
  %230 = vmatpush1.msra.mxu0 0.0
  %231 = vmatprep.subr.mxu0 0.0
  %232 = vmatpush1.msra.mxu0 0.0
  %233 = vmatprep.subr.mxu0 0.0
  %234 = vmatpush1.msra.mxu0 0.0
  %235 = vmatprep.mubr.f32.mxu0 0.0
  %236 = vmatmul.mubr.f32.gmra.mrb[0].mxu0 %v169
  %v237 = vpop.f32.mrb[0].mxu0
  %v238 = vadd.f32 %v155, %v237
  %v239 = vpop.f32.mrb[0].mxu0
  %v240 = vadd.f32 %v159, %v239
  %241 = vdwg.mxu0
  %242 = vmatprep.subr.mxu0 0.0
  %243 = vmatpush1.msra.mxu0 %v143
  %244 = vmatprep.subr.mxu0 0.0
  %245 = vmatpush1.msra.mxu0 %v146
  %246 = vmatprep.subr.mxu0 0.0
  %247 = vmatpush1.msra.mxu0 %v149
  %248 = vmatprep.subr.mxu0 0.0
  %249 = vmatpush1.msra.mxu0 0.0
  %250 = vmatprep.subr.mxu0 0.0
  %251 = vmatpush1.msra.mxu0 0.0
  %252 = vmatprep.subr.mxu0 0.0
  %253 = vmatpush1.msra.mxu0 0.0
  %254 = vmatprep.subr.mxu0 0.0
  %255 = vmatpush1.msra.mxu0 0.0
  %256 = vmatprep.subr.mxu0 0.0
  %257 = vmatpush1.msra.mxu0 0.0
  %258 = vmatprep.subr.mxu0 0.0
  %259 = vmatpush1.msra.mxu0 0.0
  %260 = vmatprep.subr.mxu0 0.0
  %261 = vmatpush1.msra.mxu0 0.0
  %262 = vmatprep.subr.mxu0 0.0
  %263 = vmatpush1.msra.mxu0 0.0
  %264 = vmatprep.subr.mxu0 0.0
  %265 = vmatpush1.msra.mxu0 0.0
  %266 = vmatprep.subr.mxu0 0.0
  %267 = vmatpush1.msra.mxu0 0.0
  %268 = vmatprep.subr.mxu0 0.0
  %269 = vmatpush1.msra.mxu0 0.0
  %270 = vmatprep.subr.mxu0 0.0
  %271 = vmatpush1.msra.mxu0 0.0
  %272 = vmatprep.subr.mxu0 0.0
  %273 = vmatpush1.msra.mxu0 0.0
  %274 = vmatprep.subr.mxu0 0.0
  %275 = vmatpush1.msra.mxu0 0.0
  %276 = vmatprep.subr.mxu0 0.0
  %277 = vmatpush1.msra.mxu0 0.0
  %278 = vmatprep.subr.mxu0 0.0
  %279 = vmatpush1.msra.mxu0 0.0
  %280 = vmatprep.subr.mxu0 0.0
  %281 = vmatpush1.msra.mxu0 0.0
  %282 = vmatprep.subr.mxu0 0.0
  %283 = vmatpush1.msra.mxu0 0.0
  %284 = vmatprep.subr.mxu0 0.0
  %285 = vmatpush1.msra.mxu0 0.0
  %286 = vmatprep.subr.mxu0 0.0
  %287 = vmatpush1.msra.mxu0 0.0
  %288 = vmatprep.subr.mxu0 0.0
  %289 = vmatpush1.msra.mxu0 0.0
  %290 = vmatprep.subr.mxu0 0.0
  %291 = vmatpush1.msra.mxu0 0.0
  %292 = vmatprep.subr.mxu0 0.0
  %293 = vmatpush1.msra.mxu0 0.0
  %294 = vmatprep.subr.mxu0 0.0
  %295 = vmatpush1.msra.mxu0 0.0
  %296 = vmatprep.subr.mxu0 0.0
  %297 = vmatpush1.msra.mxu0 0.0
  %298 = vmatprep.subr.mxu0 0.0
  %299 = vmatpush1.msra.mxu0 0.0
  %300 = vmatprep.subr.mxu0 0.0
  %301 = vmatpush1.msra.mxu0 0.0
  %302 = vmatprep.subr.mxu0 0.0
  %303 = vmatpush1.msra.mxu0 0.0
  %304 = vmatprep.subr.mxu0 0.0
  %305 = vmatpush1.msra.mxu0 0.0
  %306 = vmatprep.mubr.f32.mxu0 0.0
  %307 = vmatmul.mubr.f32.gmra.mrb[0].mxu0 %v169
  %v308 = vpop.f32.mrb[0].mxu0
  %v309 = vadd.f32 %v163, %v308
  %v310 = vpop.f32.mrb[0].mxu0
  %311 = vdwg.mxu0
  %v312 = vld [vmem:[%s5] sm:$0xff]
  %v313 = vld [vmem:[%s5 + $0x8] sm:$0xff]
  %v314 = vld [vmem:[%s6] sm:$0x1]
  %v316 = vlaneseq
  %v317 = vshrl.u32 %v316, 7
  %v318 = vsub.s32 0, %v317
  %v319 = vrot.slane %v314, %v318
  %vm321 = vcmask 130048
  %v323 = vsel %vm321, 0.0, 0
  %325 = vmatprep.subr.mxu0 0.0
  %326 = vmatpush1.msra.mxu0 %v312
  %327 = vmatprep.subr.mxu0 0.0
  %328 = vmatpush1.msra.mxu0 %v313
  %329 = vmatprep.subr.mxu0 0.0
  %330 = vmatpush1.msra.mxu0 0.0
  %331 = vmatprep.subr.mxu0 0.0
  %332 = vmatpush1.msra.mxu0 0.0
  %333 = vmatprep.subr.mxu0 0.0
  %334 = vmatpush1.msra.mxu0 0.0
  %335 = vmatprep.subr.mxu0 0.0
  %336 = vmatpush1.msra.mxu0 0.0
  %337 = vmatprep.subr.mxu0 0.0
  %338 = vmatpush1.msra.mxu0 0.0
  %339 = vmatprep.subr.mxu0 0.0
  %340 = vmatpush1.msra.mxu0 0.0
  %341 = vmatprep.subr.mxu0 0.0
  %342 = vmatpush1.msra.mxu0 0.0
  %343 = vmatprep.subr.mxu0 0.0
  %344 = vmatpush1.msra.mxu0 0.0
  %345 = vmatprep.subr.mxu0 0.0
  %346 = vmatpush1.msra.mxu0 0.0
  %347 = vmatprep.subr.mxu0 0.0
  %348 = vmatpush1.msra.mxu0 0.0
  %349 = vmatprep.subr.mxu0 0.0
  %350 = vmatpush1.msra.mxu0 0.0
  %351 = vmatprep.subr.mxu0 0.0
  %352 = vmatpush1.msra.mxu0 0.0
  %353 = vmatprep.subr.mxu0 0.0
  %354 = vmatpush1.msra.mxu0 0.0
  %355 = vmatprep.subr.mxu0 0.0
  %356 = vmatpush1.msra.mxu0 0.0
  %357 = vmatprep.subr.mxu0 0.0
  %358 = vmatpush1.msra.mxu0 0.0
  %359 = vmatprep.subr.mxu0 0.0
  %360 = vmatpush1.msra.mxu0 0.0
  %361 = vmatprep.subr.mxu0 0.0
  %362 = vmatpush1.msra.mxu0 0.0
  %363 = vmatprep.subr.mxu0 0.0
  %364 = vmatpush1.msra.mxu0 0.0
  %365 = vmatprep.subr.mxu0 0.0
  %366 = vmatpush1.msra.mxu0 0.0
  %367 = vmatprep.subr.mxu0 0.0
  %368 = vmatpush1.msra.mxu0 0.0
  %369 = vmatprep.subr.mxu0 0.0
  %370 = vmatpush1.msra.mxu0 0.0
  %371 = vmatprep.subr.mxu0 0.0
  %372 = vmatpush1.msra.mxu0 0.0
  %373 = vmatprep.subr.mxu0 0.0
  %374 = vmatpush1.msra.mxu0 0.0
  %375 = vmatprep.subr.mxu0 0.0
  %376 = vmatpush1.msra.mxu0 0.0
  %377 = vmatprep.subr.mxu0 0.0
  %378 = vmatpush1.msra.mxu0 0.0
  %379 = vmatprep.subr.mxu0 0.0
  %380 = vmatpush1.msra.mxu0 0.0
  %381 = vmatprep.subr.mxu0 0.0
  %382 = vmatpush1.msra.mxu0 0.0
  %383 = vmatprep.subr.mxu0 0.0
  %384 = vmatpush1.msra.mxu0 0.0
  %385 = vmatprep.subr.mxu0 0.0
  %386 = vmatpush1.msra.mxu0 0.0
  %387 = vmatprep.subr.mxu0 0.0
  %388 = vmatpush1.msra.mxu0 0.0
  %389 = vmatprep.mubr.f32.mxu0 0.0
  %390 = vmatmul.mubr.f32.gmra.mrb[0].mxu0 %v323
  %v391 = vpop.f32.mrb[0].mxu0
  %v392 = vadd.f32 %v319, %v391
  %v393 = vpop.f32.mrb[0].mxu0
  %394 = vdwg.mxu0
  %v395 = vadd.f32 %v238, %v392
  %v396 = vxor.u32 %v395, 2147483648
  %v397 = vmul.f32 %v396, 1.442695
  %v398 = vpow.pop %v397
  %v399 = vadd.f32 %v398, 1.0
  %v400 = vrcp.pop %v399
  %v401 = vmul.f32 1.0, %v400
  %403 = vrot.lane.b32.xlu0 %v392, 96
  %v404 = vpop.permute.xlu0 %403
  %v406 = vmul.f32 %v401, %v404
  %408 = vrot.lane.b32.xlu0 %v406, 32
  %v409 = vpop.permute.xlu0 %408
  %v411 = vadd.f32 %v238, %v409
  %v412 = vtanh.pop %v411
  %v413 = vsub.f32 1.0, %v401
  %415 = vrot.lane.b32.xlu0 %v412, 112
  %v416 = vpop.permute.xlu0 %415
  %v418 = vmul.f32 %v413, %v416
  %v419 = vmul.f32 %v401, 0.0
  %v420 = vadd.f32 %v418, %v419
  %422 = vrot.lane.b32.xlu0 %v420, 112
  %v423 = vpop.permute.xlu0 %422
  %v424 = vsel %vm321, %v423, 0
  %426 = vmatprep.subr.mxu0 0.0
  %427 = vmatpush1.msra.mxu0 %v312
  %428 = vmatprep.subr.mxu0 0.0
  %429 = vmatpush1.msra.mxu0 %v313
  %430 = vmatprep.subr.mxu0 0.0
  %431 = vmatpush1.msra.mxu0 0.0
  %432 = vmatprep.subr.mxu0 0.0
  %433 = vmatpush1.msra.mxu0 0.0
  %434 = vmatprep.subr.mxu0 0.0
  %435 = vmatpush1.msra.mxu0 0.0
  %436 = vmatprep.subr.mxu0 0.0
  %437 = vmatpush1.msra.mxu0 0.0
  %438 = vmatprep.subr.mxu0 0.0
  %439 = vmatpush1.msra.mxu0 0.0
  %440 = vmatprep.subr.mxu0 0.0
  %441 = vmatpush1.msra.mxu0 0.0
  %442 = vmatprep.subr.mxu0 0.0
  %443 = vmatpush1.msra.mxu0 0.0
  %444 = vmatprep.subr.mxu0 0.0
  %445 = vmatpush1.msra.mxu0 0.0
  %446 = vmatprep.subr.mxu0 0.0
  %447 = vmatpush1.msra.mxu0 0.0
  %448 = vmatprep.subr.mxu0 0.0
  %449 = vmatpush1.msra.mxu0 0.0
  %450 = vmatprep.subr.mxu0 0.0
  %451 = vmatpush1.msra.mxu0 0.0
  %452 = vmatprep.subr.mxu0 0.0
  %453 = vmatpush1.msra.mxu0 0.0
  %454 = vmatprep.subr.mxu0 0.0
  %455 = vmatpush1.msra.mxu0 0.0
  %456 = vmatprep.subr.mxu0 0.0
  %457 = vmatpush1.msra.mxu0 0.0
  %458 = vmatprep.subr.mxu0 0.0
  %459 = vmatpush1.msra.mxu0 0.0
  %460 = vmatprep.subr.mxu0 0.0
  %461 = vmatpush1.msra.mxu0 0.0
  %462 = vmatprep.subr.mxu0 0.0
  %463 = vmatpush1.msra.mxu0 0.0
  %464 = vmatprep.subr.mxu0 0.0
  %465 = vmatpush1.msra.mxu0 0.0
  %466 = vmatprep.subr.mxu0 0.0
  %467 = vmatpush1.msra.mxu0 0.0
  %468 = vmatprep.subr.mxu0 0.0
  %469 = vmatpush1.msra.mxu0 0.0
  %470 = vmatprep.subr.mxu0 0.0
  %471 = vmatpush1.msra.mxu0 0.0
  %472 = vmatprep.subr.mxu0 0.0
  %473 = vmatpush1.msra.mxu0 0.0
  %474 = vmatprep.subr.mxu0 0.0
  %475 = vmatpush1.msra.mxu0 0.0
  %476 = vmatprep.subr.mxu0 0.0
  %477 = vmatpush1.msra.mxu0 0.0
  %478 = vmatprep.subr.mxu0 0.0
  %479 = vmatpush1.msra.mxu0 0.0
  %480 = vmatprep.subr.mxu0 0.0
  %481 = vmatpush1.msra.mxu0 0.0
  %482 = vmatprep.subr.mxu0 0.0
  %483 = vmatpush1.msra.mxu0 0.0
  %484 = vmatprep.subr.mxu0 0.0
  %485 = vmatpush1.msra.mxu0 0.0
  %486 = vmatprep.subr.mxu0 0.0
  %487 = vmatpush1.msra.mxu0 0.0
  %488 = vmatprep.subr.mxu0 0.0
  %489 = vmatpush1.msra.mxu0 0.0
  %490 = vmatprep.mubr.f32.mxu0 0.0
  %491 = vmatmul.mubr.f32.gmra.mrb[0].mxu0 %v424
  %v492 = vpop.f32.mrb[0].mxu0
  %v493 = vadd.f32 %v319, %v492
  %v494 = vpop.f32.mrb[0].mxu0
  %495 = vdwg.mxu0
  %497 = vrot.lane.b32.xlu0 %v493, 48
  %v498 = vpop.permute.xlu0 %497
  %v500 = vadd.f32 %v238, %v498
  %v501 = vxor.u32 %v500, 2147483648
  %v502 = vmul.f32 %v501, 1.442695
  %v503 = vpow.pop %v502
  %v504 = vadd.f32 %v503, 1.0
  %v505 = vrcp.pop %v504
  %v506 = vmul.f32 1.0, %v505
  %507 = vrot.lane.b32.xlu0 %v493, 16
  %v508 = vpop.permute.xlu0 %507
  %v510 = vmul.f32 %v506, %v508
  %512 = vrot.lane.b32.xlu0 %v510, 32
  %v513 = vpop.permute.xlu0 %512
  %v515 = vadd.f32 %v238, %v513
  %v516 = vtanh.pop %v515
  %v517 = vsub.f32 1.0, %v506
  %519 = vrot.lane.b32.xlu0 %v516, 112
  %v520 = vpop.permute.xlu0 %519
  %v522 = vmul.f32 %v517, %v520
  %523 = vrot.lane.b32.xlu0 %v420, 48
  %v524 = vpop.permute.xlu0 %523
  %v526 = vmul.f32 %v506, %v524
  %v527 = vadd.f32 %v522, %v526
  %529 = vrot.lane.b32.xlu0 %v527, 64
  %v530 = vpop.permute.xlu0 %529
  %v531 = vsel %vm321, %v530, 0
  %533 = vmatprep.subr.mxu0 0.0
  %534 = vmatpush1.msra.mxu0 %v312
  %535 = vmatprep.subr.mxu0 0.0
  %536 = vmatpush1.msra.mxu0 %v313
  %537 = vmatprep.subr.mxu0 0.0
  %538 = vmatpush1.msra.mxu0 0.0
  %539 = vmatprep.subr.mxu0 0.0
  %540 = vmatpush1.msra.mxu0 0.0
  %541 = vmatprep.subr.mxu0 0.0
  %542 = vmatpush1.msra.mxu0 0.0
  %543 = vmatprep.subr.mxu0 0.0
  %544 = vmatpush1.msra.mxu0 0.0
  %545 = vmatprep.subr.mxu0 0.0
  %546 = vmatpush1.msra.mxu0 0.0
  %547 = vmatprep.subr.mxu0 0.0
  %548 = vmatpush1.msra.mxu0 0.0
  %549 = vmatprep.subr.mxu0 0.0
  %550 = vmatpush1.msra.mxu0 0.0
  %551 = vmatprep.subr.mxu0 0.0
  %552 = vmatpush1.msra.mxu0 0.0
  %553 = vmatprep.subr.mxu0 0.0
  %554 = vmatpush1.msra.mxu0 0.0
  %555 = vmatprep.subr.mxu0 0.0
  %556 = vmatpush1.msra.mxu0 0.0
  %557 = vmatprep.subr.mxu0 0.0
  %558 = vmatpush1.msra.mxu0 0.0
  %559 = vmatprep.subr.mxu0 0.0
  %560 = vmatpush1.msra.mxu0 0.0
  %561 = vmatprep.subr.mxu0 0.0
  %562 = vmatpush1.msra.mxu0 0.0
  %563 = vmatprep.subr.mxu0 0.0
  %564 = vmatpush1.msra.mxu0 0.0
  %565 = vmatprep.subr.mxu0 0.0
  %566 = vmatpush1.msra.mxu0 0.0
  %567 = vmatprep.subr.mxu0 0.0
  %568 = vmatpush1.msra.mxu0 0.0
  %569 = vmatprep.subr.mxu0 0.0
  %570 = vmatpush1.msra.mxu0 0.0
  %571 = vmatprep.subr.mxu0 0.0
  %572 = vmatpush1.msra.mxu0 0.0
  %573 = vmatprep.subr.mxu0 0.0
  %574 = vmatpush1.msra.mxu0 0.0
  %575 = vmatprep.subr.mxu0 0.0
  %576 = vmatpush1.msra.mxu0 0.0
  %577 = vmatprep.subr.mxu0 0.0
  %578 = vmatpush1.msra.mxu0 0.0
  %579 = vmatprep.subr.mxu0 0.0
  %580 = vmatpush1.msra.mxu0 0.0
  %581 = vmatprep.subr.mxu0 0.0
  %582 = vmatpush1.msra.mxu0 0.0
  %583 = vmatprep.subr.mxu0 0.0
  %584 = vmatpush1.msra.mxu0 0.0
  %585 = vmatprep.subr.mxu0 0.0
  %586 = vmatpush1.msra.mxu0 0.0
  %587 = vmatprep.subr.mxu0 0.0
  %588 = vmatpush1.msra.mxu0 0.0
  %589 = vmatprep.subr.mxu0 0.0
  %590 = vmatpush1.msra.mxu0 0.0
  %591 = vmatprep.subr.mxu0 0.0
  %592 = vmatpush1.msra.mxu0 0.0
  %593 = vmatprep.subr.mxu0 0.0
  %594 = vmatpush1.msra.mxu0 0.0
  %595 = vmatprep.subr.mxu0 0.0
  %596 = vmatpush1.msra.mxu0 0.0
  %597 = vmatprep.mubr.f32.mxu0 0.0
  %598 = vmatmul.mubr.f32.gmra.mrb[0].mxu0 %v531
  %v599 = vpop.f32.mrb[0].mxu0
  %v600 = vadd.f32 %v319, %v599
  %v601 = vpop.f32.mrb[0].mxu0
  %602 = vdwg.mxu0
  %604 = vrot.lane.b32.xlu0 %v600, 96
  %v605 = vpop.permute.xlu0 %604
  %v607 = vadd.f32 %v238, %v605
  %v608 = vxor.u32 %v607, 2147483648
  %v609 = vmul.f32 %v608, 1.442695
  %v610 = vpow.pop %v609
  %v611 = vadd.f32 %v610, 1.0
  %v612 = vrcp.pop %v611
  %v613 = vmul.f32 1.0, %v612
  %614 = vrot.lane.b32.xlu0 %v600, 64
  %v615 = vpop.permute.xlu0 %614
  %v617 = vmul.f32 %v613, %v615
  %619 = vrot.lane.b32.xlu0 %v617, 32
  %v620 = vpop.permute.xlu0 %619
  %v622 = vadd.f32 %v240, %v620
  %v623 = vtanh.pop %v622
  %v624 = vsub.f32 1.0, %v613
  %626 = vrot.lane.b32.xlu0 %v623, 112
  %v627 = vpop.permute.xlu0 %626
  %v629 = vmul.f32 %v624, %v627
  %630 = vrot.lane.b32.xlu0 %v527, 48
  %v631 = vpop.permute.xlu0 %630
  %v633 = vmul.f32 %v613, %v631
  %v634 = vadd.f32 %v629, %v633
  %636 = vrot.lane.b32.xlu0 %v634, 16
  %v637 = vpop.permute.xlu0 %636
  %v638 = vsel %vm321, %v637, 0
  %640 = vmatprep.subr.mxu0 0.0
  %641 = vmatpush1.msra.mxu0 %v312
  %642 = vmatprep.subr.mxu0 0.0
  %643 = vmatpush1.msra.mxu0 %v313
  %644 = vmatprep.subr.mxu0 0.0
  %645 = vmatpush1.msra.mxu0 0.0
  %646 = vmatprep.subr.mxu0 0.0
  %647 = vmatpush1.msra.mxu0 0.0
  %648 = vmatprep.subr.mxu0 0.0
  %649 = vmatpush1.msra.mxu0 0.0
  %650 = vmatprep.subr.mxu0 0.0
  %651 = vmatpush1.msra.mxu0 0.0
  %652 = vmatprep.subr.mxu0 0.0
  %653 = vmatpush1.msra.mxu0 0.0
  %654 = vmatprep.subr.mxu0 0.0
  %655 = vmatpush1.msra.mxu0 0.0
  %656 = vmatprep.subr.mxu0 0.0
  %657 = vmatpush1.msra.mxu0 0.0
  %658 = vmatprep.subr.mxu0 0.0
  %659 = vmatpush1.msra.mxu0 0.0
  %660 = vmatprep.subr.mxu0 0.0
  %661 = vmatpush1.msra.mxu0 0.0
  %662 = vmatprep.subr.mxu0 0.0
  %663 = vmatpush1.msra.mxu0 0.0
  %664 = vmatprep.subr.mxu0 0.0
  %665 = vmatpush1.msra.mxu0 0.0
  %666 = vmatprep.subr.mxu0 0.0
  %667 = vmatpush1.msra.mxu0 0.0
  %668 = vmatprep.subr.mxu0 0.0
  %669 = vmatpush1.msra.mxu0 0.0
  %670 = vmatprep.subr.mxu0 0.0
  %671 = vmatpush1.msra.mxu0 0.0
  %672 = vmatprep.subr.mxu0 0.0
  %673 = vmatpush1.msra.mxu0 0.0
  %674 = vmatprep.subr.mxu0 0.0
  %675 = vmatpush1.msra.mxu0 0.0
  %676 = vmatprep.subr.mxu0 0.0
  %677 = vmatpush1.msra.mxu0 0.0
  %678 = vmatprep.subr.mxu0 0.0
  %679 = vmatpush1.msra.mxu0 0.0
  %680 = vmatprep.subr.mxu0 0.0
  %681 = vmatpush1.msra.mxu0 0.0
  %682 = vmatprep.subr.mxu0 0.0
  %683 = vmatpush1.msra.mxu0 0.0
  %684 = vmatprep.subr.mxu0 0.0
  %685 = vmatpush1.msra.mxu0 0.0
  %686 = vmatprep.subr.mxu0 0.0
  %687 = vmatpush1.msra.mxu0 0.0
  %688 = vmatprep.subr.mxu0 0.0
  %689 = vmatpush1.msra.mxu0 0.0
  %690 = vmatprep.subr.mxu0 0.0
  %691 = vmatpush1.msra.mxu0 0.0
  %692 = vmatprep.subr.mxu0 0.0
  %693 = vmatpush1.msra.mxu0 0.0
  %694 = vmatprep.subr.mxu0 0.0
  %695 = vmatpush1.msra.mxu0 0.0
  %696 = vmatprep.subr.mxu0 0.0
  %697 = vmatpush1.msra.mxu0 0.0
  %698 = vmatprep.subr.mxu0 0.0
  %699 = vmatpush1.msra.mxu0 0.0
  %700 = vmatprep.subr.mxu0 0.0
  %701 = vmatpush1.msra.mxu0 0.0
  %702 = vmatprep.subr.mxu0 0.0
  %703 = vmatpush1.msra.mxu0 0.0
  %704 = vmatprep.mubr.f32.mxu0 0.0
  %705 = vmatmul.mubr.f32.gmra.mrb[0].mxu0 %v638
  %v706 = vpop.f32.mrb[0].mxu0
  %v707 = vadd.f32 %v319, %v706
  %v708 = vpop.f32.mrb[0].mxu0
  %709 = vdwg.mxu0
  %711 = vrot.lane.b32.xlu0 %v707, 16
  %v712 = vpop.permute.xlu0 %711
  %v714 = vadd.f32 %v240, %v712
  %v715 = vxor.u32 %v714, 2147483648
  %v716 = vmul.f32 %v715, 1.442695
  %v717 = vpow.pop %v716
  %v718 = vadd.f32 %v717, 1.0
  %v719 = vrcp.pop %v718
  %v720 = vmul.f32 1.0, %v719
  %721 = vrot.lane.b32.xlu0 %v707, 112
  %v722 = vpop.permute.xlu0 %721
  %v724 = vmul.f32 %v720, %v722
  %726 = vrot.lane.b32.xlu0 %v724, 32
  %v727 = vpop.permute.xlu0 %726
  %v729 = vadd.f32 %v240, %v727
  %v730 = vtanh.pop %v729
  %v731 = vsub.f32 1.0, %v720
  %733 = vrot.lane.b32.xlu0 %v730, 112
  %v734 = vpop.permute.xlu0 %733
  %v736 = vmul.f32 %v731, %v734
  %737 = vrot.lane.b32.xlu0 %v634, 48
  %v738 = vpop.permute.xlu0 %737
  %v740 = vmul.f32 %v720, %v738
  %v741 = vadd.f32 %v736, %v740
  %743 = vrot.lane.b32.xlu0 %v741, 96
  %v744 = vpop.permute.xlu0 %743
  %v745 = vsel %vm321, %v744, 0
  %747 = vmatprep.subr.mxu0 0.0
  %748 = vmatpush1.msra.mxu0 %v312
  %749 = vmatprep.subr.mxu0 0.0
  %750 = vmatpush1.msra.mxu0 %v313
  %751 = vmatprep.subr.mxu0 0.0
  %752 = vmatpush1.msra.mxu0 0.0
  %753 = vmatprep.subr.mxu0 0.0
  %754 = vmatpush1.msra.mxu0 0.0
  %755 = vmatprep.subr.mxu0 0.0
  %756 = vmatpush1.msra.mxu0 0.0
  %757 = vmatprep.subr.mxu0 0.0
  %758 = vmatpush1.msra.mxu0 0.0
  %759 = vmatprep.subr.mxu0 0.0
  %760 = vmatpush1.msra.mxu0 0.0
  %761 = vmatprep.subr.mxu0 0.0
  %762 = vmatpush1.msra.mxu0 0.0
  %763 = vmatprep.subr.mxu0 0.0
  %764 = vmatpush1.msra.mxu0 0.0
  %765 = vmatprep.subr.mxu0 0.0
  %766 = vmatpush1.msra.mxu0 0.0
  %767 = vmatprep.subr.mxu0 0.0
  %768 = vmatpush1.msra.mxu0 0.0
  %769 = vmatprep.subr.mxu0 0.0
  %770 = vmatpush1.msra.mxu0 0.0
  %771 = vmatprep.subr.mxu0 0.0
  %772 = vmatpush1.msra.mxu0 0.0
  %773 = vmatprep.subr.mxu0 0.0
  %774 = vmatpush1.msra.mxu0 0.0
  %775 = vmatprep.subr.mxu0 0.0
  %776 = vmatpush1.msra.mxu0 0.0
  %777 = vmatprep.subr.mxu0 0.0
  %778 = vmatpush1.msra.mxu0 0.0
  %779 = vmatprep.subr.mxu0 0.0
  %780 = vmatpush1.msra.mxu0 0.0
  %781 = vmatprep.subr.mxu0 0.0
  %782 = vmatpush1.msra.mxu0 0.0
  %783 = vmatprep.subr.mxu0 0.0
  %784 = vmatpush1.msra.mxu0 0.0
  %785 = vmatprep.subr.mxu0 0.0
  %786 = vmatpush1.msra.mxu0 0.0
  %787 = vmatprep.subr.mxu0 0.0
  %788 = vmatpush1.msra.mxu0 0.0
  %789 = vmatprep.subr.mxu0 0.0
  %790 = vmatpush1.msra.mxu0 0.0
  %791 = vmatprep.subr.mxu0 0.0
  %792 = vmatpush1.msra.mxu0 0.0
  %793 = vmatprep.subr.mxu0 0.0
  %794 = vmatpush1.msra.mxu0 0.0
  %795 = vmatprep.subr.mxu0 0.0
  %796 = vmatpush1.msra.mxu0 0.0
  %797 = vmatprep.subr.mxu0 0.0
  %798 = vmatpush1.msra.mxu0 0.0
  %799 = vmatprep.subr.mxu0 0.0
  %800 = vmatpush1.msra.mxu0 0.0
  %801 = vmatprep.subr.mxu0 0.0
  %802 = vmatpush1.msra.mxu0 0.0
  %803 = vmatprep.subr.mxu0 0.0
  %804 = vmatpush1.msra.mxu0 0.0
  %805 = vmatprep.subr.mxu0 0.0
  %806 = vmatpush1.msra.mxu0 0.0
  %807 = vmatprep.subr.mxu0 0.0
  %808 = vmatpush1.msra.mxu0 0.0
  %809 = vmatprep.subr.mxu0 0.0
  %810 = vmatpush1.msra.mxu0 0.0
  %811 = vmatprep.mubr.f32.mxu0 0.0
  %812 = vmatmul.mubr.f32.gmra.mrb[0].mxu0 %v745
  %v813 = vpop.f32.mrb[0].mxu0
  %v814 = vadd.f32 %v319, %v813
  %v815 = vpop.f32.mrb[0].mxu0
  %816 = vdwg.mxu0
  %818 = vrot.lane.b32.xlu0 %v814, 64
  %v819 = vpop.permute.xlu0 %818
  %v821 = vadd.f32 %v240, %v819
  %v822 = vxor.u32 %v821, 2147483648
  %v823 = vmul.f32 %v822, 1.442695
  %v824 = vpow.pop %v823
  %v825 = vadd.f32 %v824, 1.0
  %v826 = vrcp.pop %v825
  %v827 = vmul.f32 1.0, %v826
  %828 = vrot.lane.b32.xlu0 %v814, 32
  %v829 = vpop.permute.xlu0 %828
  %v831 = vmul.f32 %v827, %v829
  %833 = vrot.lane.b32.xlu0 %v831, 32
  %v834 = vpop.permute.xlu0 %833
  %v836 = vadd.f32 %v240, %v834
  %v837 = vtanh.pop %v836
  %v838 = vsub.f32 1.0, %v827
  %840 = vrot.lane.b32.xlu0 %v837, 112
  %v841 = vpop.permute.xlu0 %840
  %v843 = vmul.f32 %v838, %v841
  %844 = vrot.lane.b32.xlu0 %v741, 48
  %v845 = vpop.permute.xlu0 %844
  %v847 = vmul.f32 %v827, %v845
  %v848 = vadd.f32 %v843, %v847
  %850 = vrot.lane.b32.xlu0 %v848, 48
  %v851 = vpop.permute.xlu0 %850
  %v852 = vsel %vm321, %v851, 0
  %854 = vmatprep.subr.mxu0 0.0
  %855 = vmatpush1.msra.mxu0 %v312
  %856 = vmatprep.subr.mxu0 0.0
  %857 = vmatpush1.msra.mxu0 %v313
  %858 = vmatprep.subr.mxu0 0.0
  %859 = vmatpush1.msra.mxu0 0.0
  %860 = vmatprep.subr.mxu0 0.0
  %861 = vmatpush1.msra.mxu0 0.0
  %862 = vmatprep.subr.mxu0 0.0
  %863 = vmatpush1.msra.mxu0 0.0
  %864 = vmatprep.subr.mxu0 0.0
  %865 = vmatpush1.msra.mxu0 0.0
  %866 = vmatprep.subr.mxu0 0.0
  %867 = vmatpush1.msra.mxu0 0.0
  %868 = vmatprep.subr.mxu0 0.0
  %869 = vmatpush1.msra.mxu0 0.0
  %870 = vmatprep.subr.mxu0 0.0
  %871 = vmatpush1.msra.mxu0 0.0
  %872 = vmatprep.subr.mxu0 0.0
  %873 = vmatpush1.msra.mxu0 0.0
  %874 = vmatprep.subr.mxu0 0.0
  %875 = vmatpush1.msra.mxu0 0.0
  %876 = vmatprep.subr.mxu0 0.0
  %877 = vmatpush1.msra.mxu0 0.0
  %878 = vmatprep.subr.mxu0 0.0
  %879 = vmatpush1.msra.mxu0 0.0
  %880 = vmatprep.subr.mxu0 0.0
  %881 = vmatpush1.msra.mxu0 0.0
  %882 = vmatprep.subr.mxu0 0.0
  %883 = vmatpush1.msra.mxu0 0.0
  %884 = vmatprep.subr.mxu0 0.0
  %885 = vmatpush1.msra.mxu0 0.0
  %886 = vmatprep.subr.mxu0 0.0
  %887 = vmatpush1.msra.mxu0 0.0
  %888 = vmatprep.subr.mxu0 0.0
  %889 = vmatpush1.msra.mxu0 0.0
  %890 = vmatprep.subr.mxu0 0.0
  %891 = vmatpush1.msra.mxu0 0.0
  %892 = vmatprep.subr.mxu0 0.0
  %893 = vmatpush1.msra.mxu0 0.0
  %894 = vmatprep.subr.mxu0 0.0
  %895 = vmatpush1.msra.mxu0 0.0
  %896 = vmatprep.subr.mxu0 0.0
  %897 = vmatpush1.msra.mxu0 0.0
  %898 = vmatprep.subr.mxu0 0.0
  %899 = vmatpush1.msra.mxu0 0.0
  %900 = vmatprep.subr.mxu0 0.0
  %901 = vmatpush1.msra.mxu0 0.0
  %902 = vmatprep.subr.mxu0 0.0
  %903 = vmatpush1.msra.mxu0 0.0
  %904 = vmatprep.subr.mxu0 0.0
  %905 = vmatpush1.msra.mxu0 0.0
  %906 = vmatprep.subr.mxu0 0.0
  %907 = vmatpush1.msra.mxu0 0.0
  %908 = vmatprep.subr.mxu0 0.0
  %909 = vmatpush1.msra.mxu0 0.0
  %910 = vmatprep.subr.mxu0 0.0
  %911 = vmatpush1.msra.mxu0 0.0
  %912 = vmatprep.subr.mxu0 0.0
  %913 = vmatpush1.msra.mxu0 0.0
  %914 = vmatprep.subr.mxu0 0.0
  %915 = vmatpush1.msra.mxu0 0.0
  %916 = vmatprep.subr.mxu0 0.0
  %917 = vmatpush1.msra.mxu0 0.0
  %918 = vmatprep.mubr.f32.mxu0 0.0
  %919 = vmatmul.mubr.f32.gmra.mrb[0].mxu0 %v852
  %v920 = vpop.f32.mrb[0].mxu0
  %v921 = vadd.f32 %v319, %v920
  %v922 = vpop.f32.mrb[0].mxu0
  %923 = vdwg.mxu0
  %925 = vrot.lane.b32.xlu0 %v921, 112
  %v926 = vpop.permute.xlu0 %925
  %v928 = vadd.f32 %v240, %v926
  %v929 = vxor.u32 %v928, 2147483648
  %v930 = vmul.f32 %v929, 1.442695
  %v931 = vpow.pop %v930
  %v932 = vadd.f32 %v931, 1.0
  %v933 = vrcp.pop %v932
  %v934 = vmul.f32 1.0, %v933
  %v935 = vadd.f32 %v309, %v926
  %v936 = vxor.u32 %v935, 2147483648
  %v937 = vmul.f32 %v936, 1.442695
  %v938 = vpow.pop %v937
  %v939 = vadd.f32 %v938, 1.0
  %v940 = vrcp.pop %v939
  %v941 = vmul.f32 1.0, %v940
  %942 = vrot.lane.b32.xlu0 %v921, 80
  %v943 = vpop.permute.xlu0 %942
  %v945 = vmul.f32 %v934, %v943
  %947 = vrot.lane.b32.xlu0 %v945, 32
  %v948 = vpop.permute.xlu0 %947
  %v950 = vadd.f32 %v309, %v948
  %v951 = vtanh.pop %v950
  %v952 = vsub.f32 1.0, %v941
  %954 = vrot.lane.b32.xlu0 %v951, 112
  %v955 = vpop.permute.xlu0 %954
  %v957 = vmul.f32 %v952, %v955
  %v959 = vmul.f32 %v941, %v851
  %v960 = vadd.f32 %v957, %v959
  %v961 = vld [vmem:[%s7] sm:$0xf]
  %v962 = vld [vmem:[%s8] sm:$0x1]
  %v964 = vlaneseq
  %v965 = vshrl.u32 %v964, 7
  %v966 = vsub.s32 0, %v965
  %v967 = vrot.slane %v962, %v966
  %vm969 = vcmask 31744
  %v970 = vsel %vm969, 0.0, 0
  %vm972 = vcmask 1043456
  %v974 = vsel %vm972, %v961, 0
  %976 = vmatprep.subr.mxu0 0.0
  %977 = vmatpush1.msra.mxu0 %v974
  %978 = vmatprep.subr.mxu0 0.0
  %979 = vmatpush1.msra.mxu0 0.0
  %980 = vmatprep.subr.mxu0 0.0
  %981 = vmatpush1.msra.mxu0 0.0
  %982 = vmatprep.subr.mxu0 0.0
  %983 = vmatpush1.msra.mxu0 0.0
  %984 = vmatprep.subr.mxu0 0.0
  %985 = vmatpush1.msra.mxu0 0.0
  %986 = vmatprep.subr.mxu0 0.0
  %987 = vmatpush1.msra.mxu0 0.0
  %988 = vmatprep.subr.mxu0 0.0
  %989 = vmatpush1.msra.mxu0 0.0
  %990 = vmatprep.subr.mxu0 0.0
  %991 = vmatpush1.msra.mxu0 0.0
  %992 = vmatprep.subr.mxu0 0.0
  %993 = vmatpush1.msra.mxu0 0.0
  %994 = vmatprep.subr.mxu0 0.0
  %995 = vmatpush1.msra.mxu0 0.0
  %996 = vmatprep.subr.mxu0 0.0
  %997 = vmatpush1.msra.mxu0 0.0
  %998 = vmatprep.subr.mxu0 0.0
  %999 = vmatpush1.msra.mxu0 0.0
  %1000 = vmatprep.subr.mxu0 0.0
  %1001 = vmatpush1.msra.mxu0 0.0
  %1002 = vmatprep.subr.mxu0 0.0
  %1003 = vmatpush1.msra.mxu0 0.0
  %1004 = vmatprep.subr.mxu0 0.0
  %1005 = vmatpush1.msra.mxu0 0.0
  %1006 = vmatprep.subr.mxu0 0.0
  %1007 = vmatpush1.msra.mxu0 0.0
  %1008 = vmatprep.subr.mxu0 0.0
  %1009 = vmatpush1.msra.mxu0 0.0
  %1010 = vmatprep.subr.mxu0 0.0
  %1011 = vmatpush1.msra.mxu0 0.0
  %1012 = vmatprep.subr.mxu0 0.0
  %1013 = vmatpush1.msra.mxu0 0.0
  %1014 = vmatprep.subr.mxu0 0.0
  %1015 = vmatpush1.msra.mxu0 0.0
  %1016 = vmatprep.subr.mxu0 0.0
  %1017 = vmatpush1.msra.mxu0 0.0
  %1018 = vmatprep.subr.mxu0 0.0
  %1019 = vmatpush1.msra.mxu0 0.0
  %1020 = vmatprep.subr.mxu0 0.0
  %1021 = vmatpush1.msra.mxu0 0.0
  %1022 = vmatprep.subr.mxu0 0.0
  %1023 = vmatpush1.msra.mxu0 0.0
  %1024 = vmatprep.subr.mxu0 0.0
  %1025 = vmatpush1.msra.mxu0 0.0
  %1026 = vmatprep.subr.mxu0 0.0
  %1027 = vmatpush1.msra.mxu0 0.0
  %1028 = vmatprep.subr.mxu0 0.0
  %1029 = vmatpush1.msra.mxu0 0.0
  %1030 = vmatprep.subr.mxu0 0.0
  %1031 = vmatpush1.msra.mxu0 0.0
  %1032 = vmatprep.subr.mxu0 0.0
  %1033 = vmatpush1.msra.mxu0 0.0
  %1034 = vmatprep.subr.mxu0 0.0
  %1035 = vmatpush1.msra.mxu0 0.0
  %1036 = vmatprep.subr.mxu0 0.0
  %1037 = vmatpush1.msra.mxu0 0.0
  %1038 = vmatprep.subr.mxu0 0.0
  %1039 = vmatpush1.msra.mxu0 0.0
  %1040 = vmatprep.mubr.f32.mxu0 0.0
  %1041 = vmatmul.mubr.f32.gmra.mrb[0].mxu0 %v970
  %v1042 = vpop.f32.mrb[0].mxu0
  %v1043 = vadd.f32 %v967, %v1042
  %v1044 = vpop.f32.mrb[0].mxu0
  %1045 = vdwg.mxu0
  %1047 = vrot.lane.b32.xlu0 %v1043, 32
  %v1048 = vpop.permute.xlu0 %1047
  %v1050 = vadd.f32 %v309, %v1048
  %v1051 = vxor.u32 %v1050, 2147483648
  %v1052 = vmul.f32 %v1051, 1.442695
  %v1053 = vpow.pop %v1052
  %v1054 = vadd.f32 %v1053, 1.0
  %v1055 = vrcp.pop %v1054
  %v1056 = vmul.f32 1.0, %v1055
  %1057 = vrot.lane.b32.xlu0 %v1043, 24
  %v1058 = vpop.permute.xlu0 %1057
  %v1060 = vmul.f32 %v1056, %v1058
  %1062 = vrot.lane.b32.xlu0 %v1060, 8
  %v1063 = vpop.permute.xlu0 %1062
  %v1065 = vadd.f32 %v309, %v1063
  %v1066 = vtanh.pop %v1065
  %v1067 = vsub.f32 1.0, %v1056
  %1069 = vrot.lane.b32.xlu0 %v1066, 124
  %v1070 = vpop.permute.xlu0 %1069
  %v1072 = vmul.f32 %v1067, %v1070
  %v1073 = vmul.f32 %v1056, 0.0
  %v1074 = vadd.f32 %v1072, %v1073
  %1076 = vrot.lane.b32.xlu0 %v1074, 92
  %v1077 = vpop.permute.xlu0 %1076
  %v1078 = vsel %vm969, %v1077, 0
  %1080 = vmatprep.subr.mxu0 0.0
  %1081 = vmatpush1.msra.mxu0 %v974
  %1082 = vmatprep.subr.mxu0 0.0
  %1083 = vmatpush1.msra.mxu0 0.0
  %1084 = vmatprep.subr.mxu0 0.0
  %1085 = vmatpush1.msra.mxu0 0.0
  %1086 = vmatprep.subr.mxu0 0.0
  %1087 = vmatpush1.msra.mxu0 0.0
  %1088 = vmatprep.subr.mxu0 0.0
  %1089 = vmatpush1.msra.mxu0 0.0
  %1090 = vmatprep.subr.mxu0 0.0
  %1091 = vmatpush1.msra.mxu0 0.0
  %1092 = vmatprep.subr.mxu0 0.0
  %1093 = vmatpush1.msra.mxu0 0.0
  %1094 = vmatprep.subr.mxu0 0.0
  %1095 = vmatpush1.msra.mxu0 0.0
  %1096 = vmatprep.subr.mxu0 0.0
  %1097 = vmatpush1.msra.mxu0 0.0
  %1098 = vmatprep.subr.mxu0 0.0
  %1099 = vmatpush1.msra.mxu0 0.0
  %1100 = vmatprep.subr.mxu0 0.0
  %1101 = vmatpush1.msra.mxu0 0.0
  %1102 = vmatprep.subr.mxu0 0.0
  %1103 = vmatpush1.msra.mxu0 0.0
  %1104 = vmatprep.subr.mxu0 0.0
  %1105 = vmatpush1.msra.mxu0 0.0
  %1106 = vmatprep.subr.mxu0 0.0
  %1107 = vmatpush1.msra.mxu0 0.0
  %1108 = vmatprep.subr.mxu0 0.0
  %1109 = vmatpush1.msra.mxu0 0.0
  %1110 = vmatprep.subr.mxu0 0.0
  %1111 = vmatpush1.msra.mxu0 0.0
  %1112 = vmatprep.subr.mxu0 0.0
  %1113 = vmatpush1.msra.mxu0 0.0
  %1114 = vmatprep.subr.mxu0 0.0
  %1115 = vmatpush1.msra.mxu0 0.0
  %1116 = vmatprep.subr.mxu0 0.0
  %1117 = vmatpush1.msra.mxu0 0.0
  %1118 = vmatprep.subr.mxu0 0.0
  %1119 = vmatpush1.msra.mxu0 0.0
  %1120 = vmatprep.subr.mxu0 0.0
  %1121 = vmatpush1.msra.mxu0 0.0
  %1122 = vmatprep.subr.mxu0 0.0
  %1123 = vmatpush1.msra.mxu0 0.0
  %1124 = vmatprep.subr.mxu0 0.0
  %1125 = vmatpush1.msra.mxu0 0.0
  %1126 = vmatprep.subr.mxu0 0.0
  %1127 = vmatpush1.msra.mxu0 0.0
  %1128 = vmatprep.subr.mxu0 0.0
  %1129 = vmatpush1.msra.mxu0 0.0
  %1130 = vmatprep.subr.mxu0 0.0
  %1131 = vmatpush1.msra.mxu0 0.0
  %1132 = vmatprep.subr.mxu0 0.0
  %1133 = vmatpush1.msra.mxu0 0.0
  %1134 = vmatprep.subr.mxu0 0.0
  %1135 = vmatpush1.msra.mxu0 0.0
  %1136 = vmatprep.subr.mxu0 0.0
  %1137 = vmatpush1.msra.mxu0 0.0
  %1138 = vmatprep.subr.mxu0 0.0
  %1139 = vmatpush1.msra.mxu0 0.0
  %1140 = vmatprep.subr.mxu0 0.0
  %1141 = vmatpush1.msra.mxu0 0.0
  %1142 = vmatprep.subr.mxu0 0.0
  %1143 = vmatpush1.msra.mxu0 0.0
  %1144 = vmatprep.mubr.f32.mxu0 0.0
  %1145 = vmatmul.mubr.f32.gmra.mrb[0].mxu0 %v1078
  %v1146 = vpop.f32.mrb[0].mxu0
  %v1147 = vadd.f32 %v967, %v1146
  %v1148 = vpop.f32.mrb[0].mxu0
  %1149 = vdwg.mxu0
  %1151 = vrot.lane.b32.xlu0 %v1147, 56
  %v1152 = vpop.permute.xlu0 %1151
  %v1154 = vadd.f32 %v309, %v1152
  %v1155 = vxor.u32 %v1154, 2147483648
  %v1156 = vmul.f32 %v1155, 1.442695
  %v1157 = vpow.pop %v1156
  %v1158 = vadd.f32 %v1157, 1.0
  %v1159 = vrcp.pop %v1158
  %v1160 = vmul.f32 1.0, %v1159
  %1161 = vrot.lane.b32.xlu0 %v1147, 48
  %v1162 = vpop.permute.xlu0 %1161
  %v1164 = vmul.f32 %v1160, %v1162
  %1166 = vrot.lane.b32.xlu0 %v1164, 8
  %v1167 = vpop.permute.xlu0 %1166
  %v1169 = vadd.f32 %v309, %v1167
  %v1170 = vtanh.pop %v1169
  %v1171 = vsub.f32 1.0, %v1160
  %1173 = vrot.lane.b32.xlu0 %v1170, 124
  %v1174 = vpop.permute.xlu0 %1173
  %v1176 = vmul.f32 %v1171, %v1174
  %1177 = vrot.lane.b32.xlu0 %v1074, 24
  %v1178 = vpop.permute.xlu0 %1177
  %v1180 = vmul.f32 %v1160, %v1178
  %v1181 = vadd.f32 %v1176, %v1180
  %1182 = vrot.lane.b32.xlu0 %v1043, 44
  %v1183 = vpop.permute.xlu0 %1182
  %v1185 = vadd.f32 %v309, %v1183
  %v1186 = vxor.u32 %v1185, 2147483648
  %v1187 = vmul.f32 %v1186, 1.442695
  %v1188 = vpow.pop %v1187
  %v1189 = vadd.f32 %v1188, 1.0
  %v1190 = vrcp.pop %v1189
  %v1191 = vmul.f32 1.0, %v1190
  %1192 = vrot.lane.b32.xlu0 %v1043, 36
  %v1193 = vpop.permute.xlu0 %1192
  %v1195 = vmul.f32 %v1191, %v1193
  %1197 = vrot.lane.b32.xlu0 %v1195, 8
  %v1198 = vpop.permute.xlu0 %1197
  %v1200 = vadd.f32 %v309, %v1198
  %v1201 = vtanh.pop %v1200
  %v1202 = vsub.f32 1.0, %v1191
  %1204 = vrot.lane.b32.xlu0 %v1201, 124
  %v1205 = vpop.permute.xlu0 %1204
  %v1207 = vmul.f32 %v1202, %v1205
  %v1208 = vmul.f32 %v1191, 0.0
  %v1209 = vadd.f32 %v1207, %v1208
  %1211 = vrot.lane.b32.xlu0 %v1209, 80
  %v1212 = vpop.permute.xlu0 %1211
  %v1213 = vsel %vm969, %v1212, 0
  %1215 = vmatprep.subr.mxu0 0.0
  %1216 = vmatpush1.msra.mxu0 %v974
  %1217 = vmatprep.subr.mxu0 0.0
  %1218 = vmatpush1.msra.mxu0 0.0
  %1219 = vmatprep.subr.mxu0 0.0
  %1220 = vmatpush1.msra.mxu0 0.0
  %1221 = vmatprep.subr.mxu0 0.0
  %1222 = vmatpush1.msra.mxu0 0.0
  %1223 = vmatprep.subr.mxu0 0.0
  %1224 = vmatpush1.msra.mxu0 0.0
  %1225 = vmatprep.subr.mxu0 0.0
  %1226 = vmatpush1.msra.mxu0 0.0
  %1227 = vmatprep.subr.mxu0 0.0
  %1228 = vmatpush1.msra.mxu0 0.0
  %1229 = vmatprep.subr.mxu0 0.0
  %1230 = vmatpush1.msra.mxu0 0.0
  %1231 = vmatprep.subr.mxu0 0.0
  %1232 = vmatpush1.msra.mxu0 0.0
  %1233 = vmatprep.subr.mxu0 0.0
  %1234 = vmatpush1.msra.mxu0 0.0
  %1235 = vmatprep.subr.mxu0 0.0
  %1236 = vmatpush1.msra.mxu0 0.0
  %1237 = vmatprep.subr.mxu0 0.0
  %1238 = vmatpush1.msra.mxu0 0.0
  %1239 = vmatprep.subr.mxu0 0.0
  %1240 = vmatpush1.msra.mxu0 0.0
  %1241 = vmatprep.subr.mxu0 0.0
  %1242 = vmatpush1.msra.mxu0 0.0
  %1243 = vmatprep.subr.mxu0 0.0
  %1244 = vmatpush1.msra.mxu0 0.0
  %1245 = vmatprep.subr.mxu0 0.0
  %1246 = vmatpush1.msra.mxu0 0.0
  %1247 = vmatprep.subr.mxu0 0.0
  %1248 = vmatpush1.msra.mxu0 0.0
  %1249 = vmatprep.subr.mxu0 0.0
  %1250 = vmatpush1.msra.mxu0 0.0
  %1251 = vmatprep.subr.mxu0 0.0
  %1252 = vmatpush1.msra.mxu0 0.0
  %1253 = vmatprep.subr.mxu0 0.0
  %1254 = vmatpush1.msra.mxu0 0.0
  %1255 = vmatprep.subr.mxu0 0.0
  %1256 = vmatpush1.msra.mxu0 0.0
  %1257 = vmatprep.subr.mxu0 0.0
  %1258 = vmatpush1.msra.mxu0 0.0
  %1259 = vmatprep.subr.mxu0 0.0
  %1260 = vmatpush1.msra.mxu0 0.0
  %1261 = vmatprep.subr.mxu0 0.0
  %1262 = vmatpush1.msra.mxu0 0.0
  %1263 = vmatprep.subr.mxu0 0.0
  %1264 = vmatpush1.msra.mxu0 0.0
  %1265 = vmatprep.subr.mxu0 0.0
  %1266 = vmatpush1.msra.mxu0 0.0
  %1267 = vmatprep.subr.mxu0 0.0
  %1268 = vmatpush1.msra.mxu0 0.0
  %1269 = vmatprep.subr.mxu0 0.0
  %1270 = vmatpush1.msra.mxu0 0.0
  %1271 = vmatprep.subr.mxu0 0.0
  %1272 = vmatpush1.msra.mxu0 0.0
  %1273 = vmatprep.subr.mxu0 0.0
  %1274 = vmatpush1.msra.mxu0 0.0
  %1275 = vmatprep.subr.mxu0 0.0
  %1276 = vmatpush1.msra.mxu0 0.0
  %1277 = vmatprep.subr.mxu0 0.0
  %1278 = vmatpush1.msra.mxu0 0.0
  %1279 = vmatprep.mubr.f32.mxu0 0.0
  %1280 = vmatmul.mubr.f32.gmra.mrb[0].mxu0 %v1213
  %v1281 = vpop.f32.mrb[0].mxu0
  %v1282 = vadd.f32 %v967, %v1281
  %v1283 = vpop.f32.mrb[0].mxu0
  %1284 = vdwg.mxu0
  %1286 = vrot.lane.b32.xlu0 %v1282, 68
  %v1287 = vpop.permute.xlu0 %1286
  %v1289 = vadd.f32 %v309, %v1287
  %v1290 = vxor.u32 %v1289, 2147483648
  %v1291 = vmul.f32 %v1290, 1.442695
  %v1292 = vpow.pop %v1291
  %v1293 = vadd.f32 %v1292, 1.0
  %v1294 = vrcp.pop %v1293
  %v1295 = vmul.f32 1.0, %v1294
  %1296 = vrot.lane.b32.xlu0 %v1282, 60
  %v1297 = vpop.permute.xlu0 %1296
  %v1299 = vmul.f32 %v1295, %v1297
  %1301 = vrot.lane.b32.xlu0 %v1299, 8
  %v1302 = vpop.permute.xlu0 %1301
  %v1304 = vadd.f32 %v309, %v1302
  %v1305 = vtanh.pop %v1304
  %v1306 = vsub.f32 1.0, %v1295
  %1308 = vrot.lane.b32.xlu0 %v1305, 124
  %v1309 = vpop.permute.xlu0 %1308
  %v1311 = vmul.f32 %v1306, %v1309
  %1312 = vrot.lane.b32.xlu0 %v1209, 24
  %v1313 = vpop.permute.xlu0 %1312
  %v1315 = vmul.f32 %v1295, %v1313
  %v1316 = vadd.f32 %v1311, %v1315
  %1318 = vrot.lane.b32.xlu0 %v1181, 84
  %v1319 = vpop.permute.xlu0 %1318
  %1322 = vrot.lane.b32.xlu0 %v1316, 76
  %v1323 = vpop.permute.xlu0 %1322
  %v1325 = vsel %vm321, %v960, %v1319
  %vm1326 = vcmask 162816
  %v1327 = vsel %vm1326, %v1325, %v1323
  %v1328 = vld [vmem:[%s9] sm:$0xff]
  %v1329 = vld [vmem:[%s9 + $0x8] sm:$0xff]
  %v1330 = vld [vmem:[%s9 + $0x10] sm:$0xff]
  %v1331 = vld [vmem:[%s10] sm:$0x1]
  %v1333 = vlaneseq
  %v1334 = vshrl.u32 %v1333, 7
  %v1335 = vsub.s32 0, %v1334
  %v1336 = vrot.slane %v1331, %v1335
  %v1339 = vsel %vm167, %v1327, 0
  %1341 = vmatprep.subr.mxu0 0.0
  %1342 = vmatpush1.msra.mxu0 %v1328
  %1343 = vmatprep.subr.mxu0 0.0
  %1344 = vmatpush1.msra.mxu0 %v1329
  %1345 = vmatprep.subr.mxu0 0.0
  %1346 = vmatpush1.msra.mxu0 %v1330
  %1347 = vmatprep.subr.mxu0 0.0
  %1348 = vmatpush1.msra.mxu0 0.0
  %1349 = vmatprep.subr.mxu0 0.0
  %1350 = vmatpush1.msra.mxu0 0.0
  %1351 = vmatprep.subr.mxu0 0.0
  %1352 = vmatpush1.msra.mxu0 0.0
  %1353 = vmatprep.subr.mxu0 0.0
  %1354 = vmatpush1.msra.mxu0 0.0
  %1355 = vmatprep.subr.mxu0 0.0
  %1356 = vmatpush1.msra.mxu0 0.0
  %1357 = vmatprep.subr.mxu0 0.0
  %1358 = vmatpush1.msra.mxu0 0.0
  %1359 = vmatprep.subr.mxu0 0.0
  %1360 = vmatpush1.msra.mxu0 0.0
  %1361 = vmatprep.subr.mxu0 0.0
  %1362 = vmatpush1.msra.mxu0 0.0
  %1363 = vmatprep.subr.mxu0 0.0
  %1364 = vmatpush1.msra.mxu0 0.0
  %1365 = vmatprep.subr.mxu0 0.0
  %1366 = vmatpush1.msra.mxu0 0.0
  %1367 = vmatprep.subr.mxu0 0.0
  %1368 = vmatpush1.msra.mxu0 0.0
  %1369 = vmatprep.subr.mxu0 0.0
  %1370 = vmatpush1.msra.mxu0 0.0
  %1371 = vmatprep.subr.mxu0 0.0
  %1372 = vmatpush1.msra.mxu0 0.0
  %1373 = vmatprep.subr.mxu0 0.0
  %1374 = vmatpush1.msra.mxu0 0.0
  %1375 = vmatprep.subr.mxu0 0.0
  %1376 = vmatpush1.msra.mxu0 0.0
  %1377 = vmatprep.subr.mxu0 0.0
  %1378 = vmatpush1.msra.mxu0 0.0
  %1379 = vmatprep.subr.mxu0 0.0
  %1380 = vmatpush1.msra.mxu0 0.0
  %1381 = vmatprep.subr.mxu0 0.0
  %1382 = vmatpush1.msra.mxu0 0.0
  %1383 = vmatprep.subr.mxu0 0.0
  %1384 = vmatpush1.msra.mxu0 0.0
  %1385 = vmatprep.subr.mxu0 0.0
  %1386 = vmatpush1.msra.mxu0 0.0
  %1387 = vmatprep.subr.mxu0 0.0
  %1388 = vmatpush1.msra.mxu0 0.0
  %1389 = vmatprep.subr.mxu0 0.0
  %1390 = vmatpush1.msra.mxu0 0.0
  %1391 = vmatprep.subr.mxu0 0.0
  %1392 = vmatpush1.msra.mxu0 0.0
  %1393 = vmatprep.subr.mxu0 0.0
  %1394 = vmatpush1.msra.mxu0 0.0
  %1395 = vmatprep.subr.mxu0 0.0
  %1396 = vmatpush1.msra.mxu0 0.0
  %1397 = vmatprep.subr.mxu0 0.0
  %1398 = vmatpush1.msra.mxu0 0.0
  %1399 = vmatprep.subr.mxu0 0.0
  %1400 = vmatpush1.msra.mxu0 0.0
  %1401 = vmatprep.subr.mxu0 0.0
  %1402 = vmatpush1.msra.mxu0 0.0
  %1403 = vmatprep.subr.mxu0 0.0
  %1404 = vmatpush1.msra.mxu0 0.0
  %1405 = vmatprep.mubr.f32.mxu0 0.0
  %1406 = vmatmul.mubr.f32.gmra.mrb[0].mxu0 %v1339
  %v1407 = vpop.f32.mrb[0].mxu0
  %v1408 = vadd.f32 %v1336, %v1407
  %v1409 = vpop.f32.mrb[0].mxu0
  %1410 = vdwg.mxu0
  %v1411 = vld [vmem:[%s11] sm:$0x1]
  %v1413 = vlaneseq
  %v1414 = vshrl.u32 %v1413, 7
  %v1415 = vsub.s32 0, %v1414
  %v1416 = vrot.slane %v1411, %v1415
  %1417 = vrot.lane.b32.xlu0 %v1416, 40
  %v1418 = vpop.permute.xlu0 %1417
  %v1420 = vmul.f32 %v41, %v1418
  %1422 = vrot.lane.b32.xlu0 %v1420, 120
  %v1423 = vpop.permute.xlu0 %1422
  %v1425 = vadd.f32 %v1420, %v1423
  %1426 = vrot.lane.b32.xlu0 %v1420, 112
  %v1427 = vpop.permute.xlu0 %1426
  %v1429 = vadd.f32 %v1425, %v1427
  %1431 = vrot.lane.b32.xlu0 %v1429, 88
  %v1432 = vpop.permute.xlu0 %1431
  %v1434 = vadd.f32 %v1408, %v1432
  %v1435 = vxor.u32 %v1434, 2147483648
  %v1436 = vmul.f32 %v1435, 1.442695
  %v1437 = vpow.pop %v1436
  %v1438 = vadd.f32 %v1437, 1.0
  %v1439 = vrcp.pop %v1438
  %v1440 = vmul.f32 1.0, %v1439
  %vm1441 = vcmask 58368
  %1442 = vst.msk [vmem:[%s12] sm:$0x3] %vm1441, %v1440
  // Predicated region
  $region50: #{lstnet_forward.1} parent=0 // pred_check
    _
  $region51: #{lstnet_forward.1} parent=0 // pred_check_branch
    %1444 = sbr.rel (0) target = $region53
  $region52: #{lstnet_forward.1} parent=0 // pred_region
    _
  $region53: #{lstnet_forward.1} parent=0 // pred_fallthru
    _
  // Predicated region
  $region54: #{lstnet_forward.1} parent=0 // pred_check
    _
  $region55: #{lstnet_forward.1} parent=0 // pred_check_branch
    %1446 = sbr.rel (0) target = $region57
  $region56: #{lstnet_forward.1} parent=0 // pred_region
    _
  $region57: #{lstnet_forward.1} parent=0 // pred_fallthru
    _

</llo_original>
